<compile_context>
chip_gen: v7x
topology: tpu7x:2x2x1
jax: 0.10.0
libtpu: 0.0.40
codegen_flags: <defaults>
</compile_context>

<pallas_src>
import functools

import jax
import jax.numpy as jnp
from jax.experimental import pallas as pl
from jax.experimental.pallas import tpu as pltpu


def _round_up(n, m):
    return ((n + m - 1) // m) * m


def _sigmoid(x):
    # sigmoid(x) == 0.5 * (tanh(x/2) + 1): halves EUP traffic vs exp + reciprocal.
    return 0.5 * (jnp.tanh(0.5 * x) + 1.0)


# ----------------------------------------------------------------------------- kernel
def _lstm_step_kernel(num_layers, hidden_pad, len_ref, x_ref, *refs):
    """One grid step = one timestep of one batch block.

       grid    : (B_pad // 8, T)                         ("parallel", "arbitrary")
       len_ref : (B_blk, 1) int32                        per-row valid lengths
       x_ref   : (1, B_blk, D_pad) f32                   this timestep's input block
       weights : per layer [w_cat (D_l+Hp, 4Hp), b (1, 4Hp)], then w_fc (Hp, Op), b_fc (1, Op)
       outputs : out (1, B_blk, Op), h_n (L, B_blk, Hp), c_n (L, B_blk, Hp)
       scratch : h_scr (L, B_blk, Hp), c_scr (L, B_blk, Hp)   persist across the time axis
    """
    Hp = hidden_pad
    n_w = 2 * num_layers + 2
    w_refs = refs[:n_w]
    out_ref, hn_ref, cn_ref = refs[n_w:n_w + 3]
    h_scr, c_scr = refs[n_w + 3:]

    t = pl.program_id(1)

    @pl.when(t == 0)
    def _():
        h_scr[...] = jnp.zeros_like(h_scr)
        c_scr[...] = jnp.zeros_like(c_scr)

    mask = t < len_ref[...]                         # (B_blk, 1) bool: step valid?
    layer_in = x_ref[0]                             # (B_blk, D_pad)

    for l in range(num_layers):                     # static layer unroll
        w_cat = w_refs[2 * l][...]                  # (D_l + Hp, 4Hp) fused ih|hh weight
        b = w_refs[2 * l + 1][...]                  # (1, 4Hp)
        h_prev = h_scr[l]                           # (B_blk, Hp)
        c_prev = c_scr[l]                           # (B_blk, Hp)

        cat_in = jnp.concatenate([layer_in, h_prev], axis=1)     # lane-aligned concat
        gates = jnp.dot(cat_in, w_cat, preferred_element_type=jnp.float32) + b
        # PyTorch gate order i, f, g, o; each gate occupies its own 128-lane group.
        i_g = _sigmoid(gates[:, 0 * Hp:1 * Hp])
        f_g = _sigmoid(gates[:, 1 * Hp:2 * Hp])
        g_g = jnp.tanh(gates[:, 2 * Hp:3 * Hp])
        o_g = _sigmoid(gates[:, 3 * Hp:4 * Hp])

        c_new = f_g * c_prev + i_g * g_g
        h_new = o_g * jnp.tanh(c_new)

        # packed-sequence semantics: state does not advance past the sequence end
        c_upd = jnp.where(mask, c_new, c_prev)
        h_upd = jnp.where(mask, h_new, h_prev)
        h_scr[l] = h_upd
        c_scr[l] = c_upd
        layer_in = h_upd

    # Fused fc head per timestep; padded positions -> fc bias (matches pad_packed zeros).
    top = jnp.where(mask, layer_in, 0.0)
    w_fc = w_refs[2 * num_layers][...]              # (Hp, Op)
    b_fc = w_refs[2 * num_layers + 1][...]          # (1, Op)
    out_ref[0] = jnp.dot(top, w_fc, preferred_element_type=jnp.float32) + b_fc

    @pl.when(t == pl.num_programs(1) - 1)
    def _():
        hn_ref[...] = h_scr[...]
        cn_ref[...] = c_scr[...]


# ----------------------------------------------------------------------------- wrapper
def lstm_forward(x, params, num_layers, hidden_dim, output_dim):
    """x: (B, T, D) float32, batch_first like the PyTorch module."""
    B, T, D = x.shape
    H, O = hidden_dim, output_dim
    # lengths = T - count of (last feature == 0) along time, exactly as the module does
    lengths = (T - jnp.sum(x[:, :, -1] == 0, axis=1)).astype(jnp.int32)   # (B,)

    # TPU-aligned padded layout: B -> sublane multiple (8), feature dims -> 128 lanes.
    B_blk = 8
    B_pad = _round_up(B, B_blk)
    D_pad = _round_up(D, 128)
    H_pad = _round_up(H, 128)
    O_pad = _round_up(O, 128)

    # time-major, padded input (T, B_pad, D_pad); padded entries are zero
    x_tm = jnp.transpose(x, (1, 0, 2))
    x_tm = jnp.pad(x_tm, ((0, 0), (0, B_pad - B), (0, D_pad - D)))

    # padded batch rows get length 0 -> frozen zero state, zero top output
    len_in = jnp.pad(lengths, (0, B_pad - B)).reshape(B_pad, 1)

    def pad_gate_cols(w):
        # (rows, 4H) -> (rows, 4*H_pad): each gate zero-padded to its own 128-lane group
        return jnp.concatenate(
            [jnp.pad(w[:, k * H:(k + 1) * H], ((0, 0), (0, H_pad - H))) for k in range(4)],
            axis=1)

    weight_args = []
    for l in range(num_layers):
        in_l = D if l == 0 else H
        in_pad = D_pad if l == 0 else H_pad
        w_ih = jnp.pad(params[f"w_ih{l}"], ((0, in_pad - in_l), (0, 0)))
        w_hh = jnp.pad(params[f"w_hh{l}"], ((0, H_pad - H), (0, 0)))
        w_cat = pad_gate_cols(jnp.concatenate([w_ih, w_hh], axis=0))   # (in_pad+H_pad, 4*H_pad)
        b_cat = pad_gate_cols(params[f"b{l}"])                         # (1, 4*H_pad)
        weight_args += [w_cat, b_cat]
    w_fc = jnp.pad(params["w_fc"], ((0, H_pad - H), (0, O_pad - O)))   # (H_pad, O_pad)
    b_fc = jnp.pad(params["b_fc"], ((0, 0), (0, O_pad - O)))           # (1, O_pad)
    weight_args += [w_fc, b_fc]

    n_b = B_pad // B_blk
    kernel = functools.partial(_lstm_step_kernel, num_layers, H_pad)

    def const_spec(a):
        nd = a.ndim
        return pl.BlockSpec(a.shape, lambda bb, t, _nd=nd: (0,) * _nd)   # resident weights

    in_specs = [
        pl.BlockSpec((B_blk, 1), lambda bb, t: (bb, 0)),               # lengths
        pl.BlockSpec((1, B_blk, D_pad), lambda bb, t: (t, bb, 0)),     # x_t block (streamed)
    ] + [const_spec(w) for w in weight_args]

    out_specs = (
        pl.BlockSpec((1, B_blk, O_pad), lambda bb, t: (t, bb, 0)),     # per-step fc output
        pl.BlockSpec((num_layers, B_blk, H_pad), lambda bb, t: (0, bb, 0)),
        pl.BlockSpec((num_layers, B_blk, H_pad), lambda bb, t: (0, bb, 0)),
    )

    out_tm, h_n, c_n = pl.pallas_call(
        kernel,
        grid=(n_b, T),
        out_shape=(
            jax.ShapeDtypeStruct((T, B_pad, O_pad), jnp.float32),
            jax.ShapeDtypeStruct((num_layers, B_pad, H_pad), jnp.float32),
            jax.ShapeDtypeStruct((num_layers, B_pad, H_pad), jnp.float32),
        ),
        in_specs=in_specs,
        out_specs=out_specs,
        scratch_shapes=[
            pltpu.VMEM((num_layers, B_blk, H_pad), jnp.float32),
            pltpu.VMEM((num_layers, B_blk, H_pad), jnp.float32),
        ],
        compiler_params=pltpu.CompilerParams(
            dimension_semantics=("parallel", "arbitrary")),
    )(len_in, x_tm, *weight_args)

    out = jnp.transpose(out_tm[:, :B, :O], (1, 0, 2))                  # (B, T, O)
    h_n = h_n[:, :B, :H]
    c_n = c_n[:, :B, :H]

    # pad_packed_sequence trims the time axis to max(lengths). The data-dependent output
    # shape requires one host read of a scalar, but the pallas_call above has already been
    # dispatched asynchronously, so this does not serialize the kernel launch.
    max_len = int(jnp.max(lengths))
    return out[:, :max_len, :], (h_n, c_n)


# ----------------------------------------------------------------------------- params
def init_params(key, input_dim, hidden_dim, output_dim, num_layers):
    params = {}
    k = 1.0 / jnp.sqrt(hidden_dim)
    for l in range(num_layers):
        in_l = input_dim if l == 0 else hidden_dim
        key, k1, k2, k3, k4 = jax.random.split(key, 5)
        params[f"w_ih{l}"] = jax.random.uniform(k1, (in_l, 4 * hidden_dim), jnp.float32, -k, k)
        params[f"w_hh{l}"] = jax.random.uniform(k2, (hidden_dim, 4 * hidden_dim), jnp.float32, -k, k)
        b_ih = jax.random.uniform(k3, (1, 4 * hidden_dim), jnp.float32, -k, k)
        b_hh = jax.random.uniform(k4, (1, 4 * hidden_dim), jnp.float32, -k, k)
        params[f"b{l}"] = b_ih + b_hh
    key, k5, k6 = jax.random.split(key, 3)
    params["w_fc"] = jax.random.uniform(k5, (hidden_dim, output_dim), jnp.float32, -k, k)
    params["b_fc"] = jax.random.uniform(k6, (1, output_dim), jnp.float32, -k, k)
    return params


# ----------------------------------------------------------------------------- pure-JAX reference
def lstm_ref(x, params, num_layers, hidden_dim, output_dim):
    B, T, D = x.shape
    H = hidden_dim
    lengths = T - jnp.sum(x[:, :, -1] == 0, axis=1)
    h = jnp.zeros((num_layers, B, H), jnp.float32)
    c = jnp.zeros((num_layers, B, H), jnp.float32)
    tops = []
    for t in range(T):
        mask = (t < lengths)[:, None]
        inp = x[:, t, :]
        for l in range(num_layers):
            gates = inp @ params[f"w_ih{l}"] + h[l] @ params[f"w_hh{l}"] + params[f"b{l}"]
            i_g = jax.nn.sigmoid(gates[:, :H])
            f_g = jax.nn.sigmoid(gates[:, H:2 * H])
            g_g = jnp.tanh(gates[:, 2 * H:3 * H])
            o_g = jax.nn.sigmoid(gates[:, 3 * H:])
            cn = f_g * c[l] + i_g * g_g
            hn = o_g * jnp.tanh(cn)
            cu = jnp.where(mask, cn, c[l])
            hu = jnp.where(mask, hn, h[l])
            h = h.at[l].set(hu)
            c = c.at[l].set(cu)
            inp = hu
        tops.append(jnp.where(mask, inp, 0.0))
    top = jnp.stack(tops, axis=1)                       # (B, T, H)
    out = top @ params["w_fc"] + params["b_fc"]
    max_len = int(jnp.max(lengths))
    return out[:, :max_len, :], (h, c)


# ----------------------------------------------------------------------------- main
if __name__ == "__main__":
    B, T, D, H, O, L = 4, 8, 6, 32, 5, 2

    key = jax.random.PRNGKey(0)
    k_x, k_p = jax.random.split(key)

    # Build padded batch: trailing timesteps zeroed so the module's length rule applies.
    x = jax.random.normal(k_x, (B, T, D), dtype=jnp.float32)
    seq_lens = jnp.array([8, 5, 6, 3], dtype=jnp.int32)
    t_idx = jnp.arange(T)[None, :, None]
    x = jnp.where(t_idx < seq_lens[:, None, None], x, 0.0)

    params = init_params(k_p, D, H, O, L)

    out, (h_n, c_n) = lstm_forward(x, params, L, H, O)
    jax.block_until_ready((out, h_n, c_n))

    # Check against pure-JAX reference of the same semantics.
    out_ref, (h_ref, c_ref) = lstm_ref(x, params, L, H, O)
    assert out.shape == out_ref.shape == (B, int(jnp.max(seq_lens)), O)
    assert h_n.shape == c_n.shape == (L, B, H)
    assert jnp.allclose(out, out_ref, atol=1e-3, rtol=1e-3)
    assert jnp.allclose(h_n, h_ref, atol=1e-3, rtol=1e-3)
    assert jnp.allclose(c_n, c_ref, atol=1e-3, rtol=1e-3)

    print("KERNEL_OK")
</pallas_src>

<mosaic_0001>
module attributes {stable_mosaic.version = 11 : i64} {
  func.func @_lstm_step_kernel(%arg0: i32, %arg1: i32, %arg2: memref<8x1xi32, #tpu.memory_space<vmem>>, %arg3: memref<1x8x128xf32, #tpu.memory_space<vmem>>, %arg4: memref<256x512xf32, #tpu.memory_space<vmem>>, %arg5: memref<1x512xf32, #tpu.memory_space<vmem>>, %arg6: memref<256x512xf32, #tpu.memory_space<vmem>>, %arg7: memref<1x512xf32, #tpu.memory_space<vmem>>, %arg8: memref<128x128xf32, #tpu.memory_space<vmem>>, %arg9: memref<1x128xf32, #tpu.memory_space<vmem>>, %arg10: memref<1x8x128xf32, #tpu.memory_space<vmem>>, %arg11: memref<2x8x128xf32, #tpu.memory_space<vmem>>, %arg12: memref<2x8x128xf32, #tpu.memory_space<vmem>>, %arg13: memref<2x8x128xf32, #tpu.memory_space<vmem>>, %arg14: memref<2x8x128xf32, #tpu.memory_space<vmem>>) attributes {dimension_semantics = [#tpu.dimension_semantics<parallel>, #tpu.dimension_semantics<arbitrary>], iteration_bounds = array<i64: 1, 8>, scalar_prefetch = 0 : i64, scratch_operands = 2 : i64, tpu.core_type = #tpu.core_type<tc>, window_params = [{transform_indices = @transform_0, window_bounds = array<i64: 8, 1>}, {transform_indices = @transform_1, window_bounds = array<i64: 1, 8, 128>}, {pipeline_mode = #tpu.pipeline_mode<synchronous>, transform_indices = @transform_2, window_bounds = array<i64: 256, 512>}, {pipeline_mode = #tpu.pipeline_mode<synchronous>, transform_indices = @transform_3, window_bounds = array<i64: 1, 512>}, {pipeline_mode = #tpu.pipeline_mode<synchronous>, transform_indices = @transform_4, window_bounds = array<i64: 256, 512>}, {pipeline_mode = #tpu.pipeline_mode<synchronous>, transform_indices = @transform_5, window_bounds = array<i64: 1, 512>}, {pipeline_mode = #tpu.pipeline_mode<synchronous>, transform_indices = @transform_6, window_bounds = array<i64: 128, 128>}, {pipeline_mode = #tpu.pipeline_mode<synchronous>, transform_indices = @transform_7, window_bounds = array<i64: 1, 128>}, {transform_indices = @transform_8, window_bounds = array<i64: 1, 8, 128>}, {transform_indices = @transform_9, window_bounds = array<i64: 2, 8, 128>}, {transform_indices = @transform_10, window_bounds = array<i64: 2, 8, 128>}]} {
    %c0_i32 = arith.constant 0 : i32
    %0 = arith.cmpi eq, %arg1, %c0_i32 : i32
    %1 = arith.extui %0 : i1 to i32
    %c0_i32_0 = arith.constant 0 : i32
    %2 = arith.cmpi ne, %1, %c0_i32_0 : i32
    scf.if %2 {
      %cst_65 = arith.constant 0.000000e+00 : f32
      %129 = vector.broadcast %cst_65 : f32 to vector<2x8x128xf32>
      %c0_66 = arith.constant 0 : index
      %c0_67 = arith.constant 0 : index
      %c0_68 = arith.constant 0 : index
      %130 = vector.load %arg13[%c0_66, %c0_67, %c0_68] : memref<2x8x128xf32, #tpu.memory_space<vmem>>, vector<2x8x128xf32>
      tpu.vector_store %arg13[%c0_66, %c0_67, %c0_68], %129 {strides = array<i32>} : memref<2x8x128xf32, #tpu.memory_space<vmem>>, vector<2x8x128xf32>,
      %cst_69 = arith.constant 0.000000e+00 : f32
      %131 = vector.broadcast %cst_69 : f32 to vector<2x8x128xf32>
      %c0_70 = arith.constant 0 : index
      %c0_71 = arith.constant 0 : index
      %c0_72 = arith.constant 0 : index
      %132 = vector.load %arg14[%c0_70, %c0_71, %c0_72] : memref<2x8x128xf32, #tpu.memory_space<vmem>>, vector<2x8x128xf32>
      tpu.vector_store %arg14[%c0_70, %c0_71, %c0_72], %131 {strides = array<i32>} : memref<2x8x128xf32, #tpu.memory_space<vmem>>, vector<2x8x128xf32>,
    } else {
    }
    %c0 = arith.constant 0 : index
    %c0_1 = arith.constant 0 : index
    %3 = vector.load %arg2[%c0, %c0_1] : memref<8x1xi32, #tpu.memory_space<vmem>>, vector<8x1xi32>
    %4 = vector.broadcast %arg1 : i32 to vector<8x1xi32>
    %5 = arith.cmpi slt, %4, %3 : vector<8x1xi32>
    %c0_2 = arith.constant 0 : index
    %c0_3 = arith.constant 0 : index
    %c0_4 = arith.constant 0 : index
    %6 = vector.load %arg3[%c0_2, %c0_3, %c0_4] : memref<1x8x128xf32, #tpu.memory_space<vmem>>, vector<1x8x128xf32>
    %7 = vector.shape_cast %6 : vector<1x8x128xf32> to vector<8x128xf32>
    %c0_5 = arith.constant 0 : index
    %c0_6 = arith.constant 0 : index
    %8 = vector.load %arg4[%c0_5, %c0_6] : memref<256x512xf32, #tpu.memory_space<vmem>>, vector<256x512xf32>
    %c0_7 = arith.constant 0 : index
    %c0_8 = arith.constant 0 : index
    %9 = vector.load %arg5[%c0_7, %c0_8] : memref<1x512xf32, #tpu.memory_space<vmem>>, vector<1x512xf32>
    %c0_9 = arith.constant 0 : index
    %c0_10 = arith.constant 0 : index
    %c0_11 = arith.constant 0 : index
    %10 = vector.load %arg13[%c0_9, %c0_10, %c0_11] : memref<2x8x128xf32, #tpu.memory_space<vmem>>, vector<1x8x128xf32>
    %11 = vector.shape_cast %10 : vector<1x8x128xf32> to vector<8x128xf32>
    %c0_12 = arith.constant 0 : index
    %c0_13 = arith.constant 0 : index
    %c0_14 = arith.constant 0 : index
    %12 = vector.load %arg14[%c0_12, %c0_13, %c0_14] : memref<2x8x128xf32, #tpu.memory_space<vmem>>, vector<1x8x128xf32>
    %13 = vector.shape_cast %12 : vector<1x8x128xf32> to vector<8x128xf32>
    %14 = tpu.concatenate %7, %11 in 1 : vector<8x128xf32>, vector<8x128xf32> -> vector<8x256xf32>
    %cst = arith.constant dense<0.000000e+00> : vector<8x512xf32>
    %15 = tpu.matmul %14, %8, %cst {dimension_numbers = #tpu.dot_dimension_numbers<[1], [0], [0], [1], [0, 0, 1, 1], [], []>} : vector<8x256xf32>, vector<256x512xf32>, vector<8x512xf32> -> vector<8x512xf32>
    %16 = vector.broadcast %9 : vector<1x512xf32> to vector<8x512xf32>
    %17 = arith.addf %15, %16 : vector<8x512xf32>
    %18 = vector.extract_strided_slice %17 {offsets = [0, 0], sizes = [8, 128], strides = [1, 1]} : vector<8x512xf32> to vector<8x128xf32>
    %cst_15 = arith.constant 5.000000e-01 : f32
    %19 = vector.broadcast %cst_15 : f32 to vector<8x128xf32>
    %20 = arith.mulf %19, %18 : vector<8x128xf32>
    %21 = math.tanh %20 : vector<8x128xf32>
    %cst_16 = arith.constant 1.000000e+00 : f32
    %22 = vector.broadcast %cst_16 : f32 to vector<8x128xf32>
    %23 = arith.addf %21, %22 : vector<8x128xf32>
    %cst_17 = arith.constant 5.000000e-01 : f32
    %24 = vector.broadcast %cst_17 : f32 to vector<8x128xf32>
    %25 = arith.mulf %24, %23 : vector<8x128xf32>
    %26 = vector.extract_strided_slice %17 {offsets = [0, 128], sizes = [8, 128], strides = [1, 1]} : vector<8x512xf32> to vector<8x128xf32>
    %cst_18 = arith.constant 5.000000e-01 : f32
    %27 = vector.broadcast %cst_18 : f32 to vector<8x128xf32>
    %28 = arith.mulf %27, %26 : vector<8x128xf32>
    %29 = math.tanh %28 : vector<8x128xf32>
    %cst_19 = arith.constant 1.000000e+00 : f32
    %30 = vector.broadcast %cst_19 : f32 to vector<8x128xf32>
    %31 = arith.addf %29, %30 : vector<8x128xf32>
    %cst_20 = arith.constant 5.000000e-01 : f32
    %32 = vector.broadcast %cst_20 : f32 to vector<8x128xf32>
    %33 = arith.mulf %32, %31 : vector<8x128xf32>
    %34 = vector.extract_strided_slice %17 {offsets = [0, 256], sizes = [8, 128], strides = [1, 1]} : vector<8x512xf32> to vector<8x128xf32>
    %35 = math.tanh %34 : vector<8x128xf32>
    %36 = vector.extract_strided_slice %17 {offsets = [0, 384], sizes = [8, 128], strides = [1, 1]} : vector<8x512xf32> to vector<8x128xf32>
    %cst_21 = arith.constant 5.000000e-01 : f32
    %37 = vector.broadcast %cst_21 : f32 to vector<8x128xf32>
    %38 = arith.mulf %37, %36 : vector<8x128xf32>
    %39 = math.tanh %38 : vector<8x128xf32>
    %cst_22 = arith.constant 1.000000e+00 : f32
    %40 = vector.broadcast %cst_22 : f32 to vector<8x128xf32>
    %41 = arith.addf %39, %40 : vector<8x128xf32>
    %cst_23 = arith.constant 5.000000e-01 : f32
    %42 = vector.broadcast %cst_23 : f32 to vector<8x128xf32>
    %43 = arith.mulf %42, %41 : vector<8x128xf32>
    %44 = arith.mulf %33, %13 : vector<8x128xf32>
    %45 = arith.mulf %25, %35 : vector<8x128xf32>
    %46 = arith.addf %44, %45 : vector<8x128xf32>
    %47 = math.tanh %46 : vector<8x128xf32>
    %48 = arith.mulf %43, %47 : vector<8x128xf32>
    %49 = vector.shape_cast %5 : vector<8x1xi1> to vector<8x1xi1>
    %50 = vector.broadcast %49 : vector<8x1xi1> to vector<8x128xi1>
    %51 = arith.select %50, %46, %13 : vector<8x128xi1>, vector<8x128xf32>
    %52 = vector.shape_cast %5 : vector<8x1xi1> to vector<8x1xi1>
    %53 = vector.broadcast %52 : vector<8x1xi1> to vector<8x128xi1>
    %54 = arith.select %53, %48, %11 : vector<8x128xi1>, vector<8x128xf32>
    %c0_24 = arith.constant 0 : index
    %c0_25 = arith.constant 0 : index
    %c0_26 = arith.constant 0 : index
    %55 = vector.load %arg13[%c0_24, %c0_25, %c0_26] : memref<2x8x128xf32, #tpu.memory_space<vmem>>, vector<1x8x128xf32>
    %56 = vector.shape_cast %55 : vector<1x8x128xf32> to vector<8x128xf32>
    %57 = vector.shape_cast %54 : vector<8x128xf32> to vector<1x8x128xf32>
    tpu.vector_store %arg13[%c0_24, %c0_25, %c0_26], %57 {strides = array<i32>} : memref<2x8x128xf32, #tpu.memory_space<vmem>>, vector<1x8x128xf32>,
    %c0_27 = arith.constant 0 : index
    %c0_28 = arith.constant 0 : index
    %c0_29 = arith.constant 0 : index
    %58 = vector.load %arg14[%c0_27, %c0_28, %c0_29] : memref<2x8x128xf32, #tpu.memory_space<vmem>>, vector<1x8x128xf32>
    %59 = vector.shape_cast %58 : vector<1x8x128xf32> to vector<8x128xf32>
    %60 = vector.shape_cast %51 : vector<8x128xf32> to vector<1x8x128xf32>
    tpu.vector_store %arg14[%c0_27, %c0_28, %c0_29], %60 {strides = array<i32>} : memref<2x8x128xf32, #tpu.memory_space<vmem>>, vector<1x8x128xf32>,
    %c0_30 = arith.constant 0 : index
    %c0_31 = arith.constant 0 : index
    %61 = vector.load %arg6[%c0_30, %c0_31] : memref<256x512xf32, #tpu.memory_space<vmem>>, vector<256x512xf32>
    %c0_32 = arith.constant 0 : index
    %c0_33 = arith.constant 0 : index
    %62 = vector.load %arg7[%c0_32, %c0_33] : memref<1x512xf32, #tpu.memory_space<vmem>>, vector<1x512xf32>
    %c1 = arith.constant 1 : index
    %c0_34 = arith.constant 0 : index
    %c0_35 = arith.constant 0 : index
    %63 = vector.load %arg13[%c1, %c0_34, %c0_35] : memref<2x8x128xf32, #tpu.memory_space<vmem>>, vector<1x8x128xf32>
    %64 = vector.shape_cast %63 : vector<1x8x128xf32> to vector<8x128xf32>
    %c1_36 = arith.constant 1 : index
    %c0_37 = arith.constant 0 : index
    %c0_38 = arith.constant 0 : index
    %65 = vector.load %arg14[%c1_36, %c0_37, %c0_38] : memref<2x8x128xf32, #tpu.memory_space<vmem>>, vector<1x8x128xf32>
    %66 = vector.shape_cast %65 : vector<1x8x128xf32> to vector<8x128xf32>
    %67 = tpu.concatenate %54, %64 in 1 : vector<8x128xf32>, vector<8x128xf32> -> vector<8x256xf32>
    %cst_39 = arith.constant dense<0.000000e+00> : vector<8x512xf32>
    %68 = tpu.matmul %67, %61, %cst_39 {dimension_numbers = #tpu.dot_dimension_numbers<[1], [0], [0], [1], [0, 0, 1, 1], [], []>} : vector<8x256xf32>, vector<256x512xf32>, vector<8x512xf32> -> vector<8x512xf32>
    %69 = vector.broadcast %62 : vector<1x512xf32> to vector<8x512xf32>
    %70 = arith.addf %68, %69 : vector<8x512xf32>
    %71 = vector.extract_strided_slice %70 {offsets = [0, 0], sizes = [8, 128], strides = [1, 1]} : vector<8x512xf32> to vector<8x128xf32>
    %cst_40 = arith.constant 5.000000e-01 : f32
    %72 = vector.broadcast %cst_40 : f32 to vector<8x128xf32>
    %73 = arith.mulf %72, %71 : vector<8x128xf32>
    %74 = math.tanh %73 : vector<8x128xf32>
    %cst_41 = arith.constant 1.000000e+00 : f32
    %75 = vector.broadcast %cst_41 : f32 to vector<8x128xf32>
    %76 = arith.addf %74, %75 : vector<8x128xf32>
    %cst_42 = arith.constant 5.000000e-01 : f32
    %77 = vector.broadcast %cst_42 : f32 to vector<8x128xf32>
    %78 = arith.mulf %77, %76 : vector<8x128xf32>
    %79 = vector.extract_strided_slice %70 {offsets = [0, 128], sizes = [8, 128], strides = [1, 1]} : vector<8x512xf32> to vector<8x128xf32>
    %cst_43 = arith.constant 5.000000e-01 : f32
    %80 = vector.broadcast %cst_43 : f32 to vector<8x128xf32>
    %81 = arith.mulf %80, %79 : vector<8x128xf32>
    %82 = math.tanh %81 : vector<8x128xf32>
    %cst_44 = arith.constant 1.000000e+00 : f32
    %83 = vector.broadcast %cst_44 : f32 to vector<8x128xf32>
    %84 = arith.addf %82, %83 : vector<8x128xf32>
    %cst_45 = arith.constant 5.000000e-01 : f32
    %85 = vector.broadcast %cst_45 : f32 to vector<8x128xf32>
    %86 = arith.mulf %85, %84 : vector<8x128xf32>
    %87 = vector.extract_strided_slice %70 {offsets = [0, 256], sizes = [8, 128], strides = [1, 1]} : vector<8x512xf32> to vector<8x128xf32>
    %88 = math.tanh %87 : vector<8x128xf32>
    %89 = vector.extract_strided_slice %70 {offsets = [0, 384], sizes = [8, 128], strides = [1, 1]} : vector<8x512xf32> to vector<8x128xf32>
    %cst_46 = arith.constant 5.000000e-01 : f32
    %90 = vector.broadcast %cst_46 : f32 to vector<8x128xf32>
    %91 = arith.mulf %90, %89 : vector<8x128xf32>
    %92 = math.tanh %91 : vector<8x128xf32>
    %cst_47 = arith.constant 1.000000e+00 : f32
    %93 = vector.broadcast %cst_47 : f32 to vector<8x128xf32>
    %94 = arith.addf %92, %93 : vector<8x128xf32>
    %cst_48 = arith.constant 5.000000e-01 : f32
    %95 = vector.broadcast %cst_48 : f32 to vector<8x128xf32>
    %96 = arith.mulf %95, %94 : vector<8x128xf32>
    %97 = arith.mulf %86, %66 : vector<8x128xf32>
    %98 = arith.mulf %78, %88 : vector<8x128xf32>
    %99 = arith.addf %97, %98 : vector<8x128xf32>
    %100 = math.tanh %99 : vector<8x128xf32>
    %101 = arith.mulf %96, %100 : vector<8x128xf32>
    %102 = vector.shape_cast %5 : vector<8x1xi1> to vector<8x1xi1>
    %103 = vector.broadcast %102 : vector<8x1xi1> to vector<8x128xi1>
    %104 = arith.select %103, %99, %66 : vector<8x128xi1>, vector<8x128xf32>
    %105 = vector.shape_cast %5 : vector<8x1xi1> to vector<8x1xi1>
    %106 = vector.broadcast %105 : vector<8x1xi1> to vector<8x128xi1>
    %107 = arith.select %106, %101, %64 : vector<8x128xi1>, vector<8x128xf32>
    %c1_49 = arith.constant 1 : index
    %c0_50 = arith.constant 0 : index
    %c0_51 = arith.constant 0 : index
    %108 = vector.load %arg13[%c1_49, %c0_50, %c0_51] : memref<2x8x128xf32, #tpu.memory_space<vmem>>, vector<1x8x128xf32>
    %109 = vector.shape_cast %108 : vector<1x8x128xf32> to vector<8x128xf32>
    %110 = vector.shape_cast %107 : vector<8x128xf32> to vector<1x8x128xf32>
    tpu.vector_store %arg13[%c1_49, %c0_50, %c0_51], %110 {strides = array<i32>} : memref<2x8x128xf32, #tpu.memory_space<vmem>>, vector<1x8x128xf32>,
    %c1_52 = arith.constant 1 : index
    %c0_53 = arith.constant 0 : index
    %c0_54 = arith.constant 0 : index
    %111 = vector.load %arg14[%c1_52, %c0_53, %c0_54] : memref<2x8x128xf32, #tpu.memory_space<vmem>>, vector<1x8x128xf32>
    %112 = vector.shape_cast %111 : vector<1x8x128xf32> to vector<8x128xf32>
    %113 = vector.shape_cast %104 : vector<8x128xf32> to vector<1x8x128xf32>
    tpu.vector_store %arg14[%c1_52, %c0_53, %c0_54], %113 {strides = array<i32>} : memref<2x8x128xf32, #tpu.memory_space<vmem>>, vector<1x8x128xf32>,
    %cst_55 = arith.constant 0.000000e+00 : f32
    %114 = vector.shape_cast %5 : vector<8x1xi1> to vector<8x1xi1>
    %115 = vector.broadcast %114 : vector<8x1xi1> to vector<8x128xi1>
    %116 = vector.broadcast %cst_55 : f32 to vector<8x128xf32>
    %117 = arith.select %115, %107, %116 : vector<8x128xi1>, vector<8x128xf32>
    %c0_56 = arith.constant 0 : index
    %c0_57 = arith.constant 0 : index
    %118 = vector.load %arg8[%c0_56, %c0_57] : memref<128x128xf32, #tpu.memory_space<vmem>>, vector<128x128xf32>
    %c0_58 = arith.constant 0 : index
    %c0_59 = arith.constant 0 : index
    %119 = vector.load %arg9[%c0_58, %c0_59] : memref<1x128xf32, #tpu.memory_space<vmem>>, vector<1x128xf32>
    %cst_60 = arith.constant dense<0.000000e+00> : vector<8x128xf32>
    %120 = tpu.matmul %117, %118, %cst_60 {dimension_numbers = #tpu.dot_dimension_numbers<[1], [0], [0], [1], [0, 0, 1, 1], [], []>} : vector<8x128xf32>, vector<128x128xf32>, vector<8x128xf32> -> vector<8x128xf32>
    %121 = vector.broadcast %119 : vector<1x128xf32> to vector<8x128xf32>
    %122 = arith.addf %120, %121 : vector<8x128xf32>
    %c0_61 = arith.constant 0 : index
    %c0_62 = arith.constant 0 : index
    %c0_63 = arith.constant 0 : index
    %123 = vector.load %arg10[%c0_61, %c0_62, %c0_63] : memref<1x8x128xf32, #tpu.memory_space<vmem>>, vector<1x8x128xf32>
    %124 = vector.shape_cast %123 : vector<1x8x128xf32> to vector<8x128xf32>
    %125 = vector.shape_cast %122 : vector<8x128xf32> to vector<1x8x128xf32>
    tpu.vector_store %arg10[%c0_61, %c0_62, %c0_63], %125 {strides = array<i32>} : memref<1x8x128xf32, #tpu.memory_space<vmem>>, vector<1x8x128xf32>,
    %c7_i32 = arith.constant 7 : i32
    %126 = arith.cmpi eq, %arg1, %c7_i32 : i32
    %127 = arith.extui %126 : i1 to i32
    %c0_i32_64 = arith.constant 0 : i32
    %128 = arith.cmpi ne, %127, %c0_i32_64 : i32
    scf.if %128 {
      %c0_65 = arith.constant 0 : index
      %c0_66 = arith.constant 0 : index
      %c0_67 = arith.constant 0 : index
      %129 = vector.load %arg13[%c0_65, %c0_66, %c0_67] : memref<2x8x128xf32, #tpu.memory_space<vmem>>, vector<2x8x128xf32>
      %c0_68 = arith.constant 0 : index
      %c0_69 = arith.constant 0 : index
      %c0_70 = arith.constant 0 : index
      %130 = vector.load %arg11[%c0_68, %c0_69, %c0_70] : memref<2x8x128xf32, #tpu.memory_space<vmem>>, vector<2x8x128xf32>
      tpu.vector_store %arg11[%c0_68, %c0_69, %c0_70], %129 {strides = array<i32>} : memref<2x8x128xf32, #tpu.memory_space<vmem>>, vector<2x8x128xf32>,
      %c0_71 = arith.constant 0 : index
      %c0_72 = arith.constant 0 : index
      %c0_73 = arith.constant 0 : index
      %131 = vector.load %arg14[%c0_71, %c0_72, %c0_73] : memref<2x8x128xf32, #tpu.memory_space<vmem>>, vector<2x8x128xf32>
      %c0_74 = arith.constant 0 : index
      %c0_75 = arith.constant 0 : index
      %c0_76 = arith.constant 0 : index
      %132 = vector.load %arg12[%c0_74, %c0_75, %c0_76] : memref<2x8x128xf32, #tpu.memory_space<vmem>>, vector<2x8x128xf32>
      tpu.vector_store %arg12[%c0_74, %c0_75, %c0_76], %131 {strides = array<i32>} : memref<2x8x128xf32, #tpu.memory_space<vmem>>, vector<2x8x128xf32>,
    } else {
    }
    return
  }
  func.func @transform_0(%arg0: i32, %arg1: i32) -> (i32, i32) {
    %c0_i32 = arith.constant 0 : i32
    %c0_i32_0 = arith.constant 0 : i32
    return %arg0, %c0_i32 : i32, i32
  }
  func.func @transform_1(%arg0: i32, %arg1: i32) -> (i32, i32, i32) {
    %c0_i32 = arith.constant 0 : i32
    %c0_i32_0 = arith.constant 0 : i32
    return %arg1, %arg0, %c0_i32 : i32, i32, i32
  }
  func.func @transform_2(%arg0: i32, %arg1: i32) -> (i32, i32) {
    %c0_i32 = arith.constant 0 : i32
    %c0_i32_0 = arith.constant 0 : i32
    %c0_i32_1 = arith.constant 0 : i32
    return %c0_i32, %c0_i32_0 : i32, i32
  }
  func.func @transform_3(%arg0: i32, %arg1: i32) -> (i32, i32) {
    %c0_i32 = arith.constant 0 : i32
    %c0_i32_0 = arith.constant 0 : i32
    %c0_i32_1 = arith.constant 0 : i32
    return %c0_i32, %c0_i32_0 : i32, i32
  }
  func.func @transform_4(%arg0: i32, %arg1: i32) -> (i32, i32) {
    %c0_i32 = arith.constant 0 : i32
    %c0_i32_0 = arith.constant 0 : i32
    %c0_i32_1 = arith.constant 0 : i32
    return %c0_i32, %c0_i32_0 : i32, i32
  }
  func.func @transform_5(%arg0: i32, %arg1: i32) -> (i32, i32) {
    %c0_i32 = arith.constant 0 : i32
    %c0_i32_0 = arith.constant 0 : i32
    %c0_i32_1 = arith.constant 0 : i32
    return %c0_i32, %c0_i32_0 : i32, i32
  }
  func.func @transform_6(%arg0: i32, %arg1: i32) -> (i32, i32) {
    %c0_i32 = arith.constant 0 : i32
    %c0_i32_0 = arith.constant 0 : i32
    %c0_i32_1 = arith.constant 0 : i32
    return %c0_i32, %c0_i32_0 : i32, i32
  }
  func.func @transform_7(%arg0: i32, %arg1: i32) -> (i32, i32) {
    %c0_i32 = arith.constant 0 : i32
    %c0_i32_0 = arith.constant 0 : i32
    %c0_i32_1 = arith.constant 0 : i32
    return %c0_i32, %c0_i32_0 : i32, i32
  }
  func.func @transform_8(%arg0: i32, %arg1: i32) -> (i32, i32, i32) {
    %c0_i32 = arith.constant 0 : i32
    %c0_i32_0 = arith.constant 0 : i32
    return %arg1, %arg0, %c0_i32 : i32, i32, i32
  }
  func.func @transform_9(%arg0: i32, %arg1: i32) -> (i32, i32, i32) {
    %c0_i32 = arith.constant 0 : i32
    %c0_i32_0 = arith.constant 0 : i32
    %c0_i32_1 = arith.constant 0 : i32
    return %c0_i32, %arg0, %c0_i32_0 : i32, i32, i32
  }
  func.func @transform_10(%arg0: i32, %arg1: i32) -> (i32, i32, i32) {
    %c0_i32 = arith.constant 0 : i32
    %c0_i32_0 = arith.constant 0 : i32
    %c0_i32_1 = arith.constant 0 : i32
    return %c0_i32, %arg0, %c0_i32_0 : i32, i32, i32
  }
}

</mosaic_0001>

<llo_original>
// kernel: tpu_custom_call.1
$region0: #{tpu_custom_call.1}
  #allocation0 [shape = 'u32[]', space=smem, size = 0x4, offset = 0x4, fixed_abs, tag = 'smem constant byte address 0x4 - core index']
  #allocation1 [shape = 'u32[144,128]{1,0:T(1,128)}', space=vmem, size = 0x12000, scoped, tag = 'internal scratch']
  #allocation2 [shape = 'f32[2,8,128]{2,1,0:T(8,128)}', space=vmem, size = 0x2000, scoped, tag = 'scratch operand']
  #allocation3 [shape = 'f32[2,8,128]{2,1,0:T(8,128)}', space=vmem, size = 0x2000, scoped, tag = 'scratch operand']
  %s0 = inlined_call_operand.vmem [shape: s32[8,1], index: 0, kind: input, shape index: {}]
  %s1 = inlined_call_operand.hbm [shape: f32[8,8,128], index: 1, kind: input, shape index: {}]
  %s2 = inlined_call_operand.hbm [shape: f32[256,512], index: 2, kind: input, shape index: {}]
  %s3 = inlined_call_operand.vmem [shape: f32[1,512], index: 3, kind: input, shape index: {}]
  %s4 = inlined_call_operand.hbm [shape: f32[256,512], index: 4, kind: input, shape index: {}]
  %s5 = inlined_call_operand.vmem [shape: f32[1,512], index: 5, kind: input, shape index: {}]
  %s6 = inlined_call_operand.hbm [shape: f32[128,128], index: 6, kind: input, shape index: {}]
  %s7 = inlined_call_operand.vmem [shape: f32[1,128], index: 7, kind: input, shape index: {}]
  %s8 = inlined_call_operand.hbm [shape: f32[8,8,128], index: 8, kind: output, shape index: {0}]
  %s9 = inlined_call_operand.hbm [shape: f32[2,8,128], index: 9, kind: output, shape index: {1}]
  %s10 = inlined_call_operand.hbm [shape: f32[2,8,128], index: 10, kind: output, shape index: {2}]
  %11 = xla_tuple %s8, %s9, %s10
  %s12 = sld [smem:[#allocation0]]
  $region105: #{tpu_custom_call.1} parent=0
    _
  %s14 = ssub.s32 1, %s12
  %s15 = scalar_select 0, %s14, %s12
  $region1: #{tpu_custom_call.1} parent=0
    #allocation4 [shape = 'u8[8192]{0}', space=vmem, size = 0x2000, scoped, tag = 'input window, operand 1']
    #allocation5 [shape = 's32[2]{0}', space=sflag, size = 0x8, scoped, tag = 'scoped memory for tpu_custom_call.1']
    #allocation6 [shape = 's32[2]{0}', space=sflag, size = 0x8, scoped, tag = 'scoped memory for tpu_custom_call.1']
    #allocation7 [shape = 'u8[524288]{0}', space=vmem, size = 0x80000, scoped, tag = 'input window, operand 2, single buffered']
    #allocation8 [shape = 's32[1]{0}', space=sflag, size = 0x4, scoped, tag = 'scoped memory for tpu_custom_call.1']
    #allocation9 [shape = 'u8[524288]{0}', space=vmem, size = 0x80000, scoped, tag = 'input window, operand 4, single buffered']
    #allocation10 [shape = 'u8[65536]{0}', space=vmem, size = 0x10000, scoped, tag = 'input window, operand 6, single buffered']
    #allocation11 [shape = 's32[1]{0}', space=sflag, size = 0x4, scoped, tag = 'scoped memory for tpu_custom_call.1']
    #allocation12 [shape = 'u8[8192]{0}', space=vmem, size = 0x2000, scoped, tag = 'output window, operand 0']
    #allocation13 [shape = 'u8[8192]{0}', space=vmem, size = 0x2000, scoped, tag = 'output window, operand 1, single buffered']
    #allocation14 [shape = 's32[1]{0}', space=sflag, size = 0x4, scoped, tag = 'scoped memory for tpu_custom_call.1']
    #allocation15 [shape = 'u8[8192]{0}', space=vmem, size = 0x2000, scoped, tag = 'output window, operand 2, single buffered']
    %16 = vsyncpa [#allocation5], 0
    %s17 = scalar_lea.sflag [#allocation5], 1
    %18 = vsyncpa %s17, 0
    %19 = vsyncpa [#allocation8], 0
    %20 = vsyncpa [#allocation11], 0
    %21 = vsyncpa [#allocation6], 0
    %s22 = scalar_lea.sflag [#allocation6], 1
    %23 = vsyncpa %s22, 0
    %24 = vsyncpa [#allocation14], 0
    loop: start=0, step=1, limit=10
    $region2: #{tpu_custom_call.1} parent=1 // loop_pre_header
      _
    $region3: #{tpu_custom_call.1} parent=1 // loop_header
      %s26 = sphi 0, %s30
      %p27 = scmp.ge.s32.totalorder %s26, 10
      %s33 = sphi 0, %s45
      %s34 = sphi 0, %s41
      %s35 = sphi 0, %s33
      %s36 = sphi 0, %s34
      %s37 = sphi 0, %s35
      %s38 = sphi 0, %s36
      %s48 = sphi 0, %s50
      %s51 = sphi 0, %s48
      %s52 = sphi 0, %s51
      %s68 = sphi 0, %s52
      %s76 = sphi 0, %s78
      %s79 = sphi 0, %s76
      %s80 = sphi 0, %s79
      %s96 = sphi 0, %s80
      %s100 = sphi 0, %s100
      %s102 = sphi 0, %s100
      %s103 = sphi 0, %s102
      %s117 = sphi 0, %s103
      %s121 = sphi 0, %s121
      %s123 = sphi 0, %s121
      %s124 = sphi 0, %s123
      %s138 = sphi 0, %s124
      %s142 = sphi 0, %s142
      %s144 = sphi 0, %s142
      %s145 = sphi 0, %s144
      %s159 = sphi 0, %s145
      %s163 = sphi 0, %s163
      %s165 = sphi 0, %s163
      %s166 = sphi 0, %s165
      %s180 = sphi 0, %s166
      %s184 = sphi 0, %s184
      %s186 = sphi 0, %s184
      %s187 = sphi 0, %s186
      %s201 = sphi 0, %s187
      %s205 = sphi 0, %s205
      %s207 = sphi 0, %s205
      %s208 = sphi 0, %s207
      %s222 = sphi 0, %s208
      %s230 = sphi 0, %s232
      %s233 = sphi 0, %s230
      %s234 = sphi 0, %s233
      %s250 = sphi 0, %s234
      %s256 = sphi 0, %s258
      %s259 = sphi 0, %s256
      %s260 = sphi 0, %s259
      %s276 = sphi 0, %s260
      %s282 = sphi 0, %s284
      %s285 = sphi 0, %s282
      %s286 = sphi 0, %s285
      %s302 = sphi 0, %s286
    $region4: #{tpu_custom_call.1} parent=1 // loop_header_branch
      %29 = sbr.rel (%p27) target = $region8
    $region5: #{tpu_custom_call.1} parent=1 // loop_body
      %s31 = ssub.s32 %s26, 1
      %s32 = ssub.s32 %s26, 2
      %s39 = sadd.s32 1, %s34
      %p40 = scmp.ge.s32.totalorder %s39, 8
      %s41 = scalar_select %p40, 0, %s39
      %s42 = sadd.s32 1, %s33
      %s43 = scalar_select %p40, %s42, %s33
      %p44 = scmp.ge.s32.totalorder %s43, 1
      %s45 = scalar_select %p44, 0, %s43
      %s46 = ssub.s32 %s33, %s45
      %p47 = scmp.eq.s32.totalorder %s46, 0
      %s49 = sadd.s32 %s48, 1
      %s50 = scalar_select %p47, %s48, %s49
      %p53 = pneg %p47
      %p54 = scmp.eq.s32.totalorder %s26, 7
      %p55 = por %p53, %p54
      %p56 = scmp.ne.s32.totalorder %s48, %s51
      %p57 = scmp.eq.s32.totalorder %s26, 0
      %p58 = por %p56, %p57
      %p59 = scmp.ne.s32.totalorder %s48, %s51
      %p60 = scmp.eq.s32.totalorder %s31, 7
      %p61 = por %p59, %p60
      %p62 = scmp.ne.s32.totalorder %s51, %s52
      %p63 = scmp.eq.s32.totalorder %s31, 0
      %p64 = por %p62, %p63
      %p65 = scmp.ne.s32.totalorder %s51, %s52
      %p66 = scmp.eq.s32.totalorder %s32, 7
      %p67 = por %p65, %p66
      %p69 = scmp.ne.s32.totalorder %s52, %s68
      %p70 = scmp.eq.s32.totalorder %s32, 0
      %p71 = por %p69, %p70
      %s72 = ssub.s32 %s34, %s41
      %s73 = ssub.s32 %s33, %s45
      %s74 = sor.u32 %s72, %s73
      %p75 = scmp.eq.s32.totalorder %s74, 0
      %s77 = sadd.s32 %s76, 1
      %s78 = scalar_select %p75, %s76, %s77
      %p81 = pneg %p75
      %p82 = scmp.eq.s32.totalorder %s26, 7
      %p83 = por %p81, %p82
      %p84 = scmp.ne.s32.totalorder %s76, %s79
      %p85 = scmp.eq.s32.totalorder %s26, 0
      %p86 = por %p84, %p85
      %p87 = scmp.ne.s32.totalorder %s76, %s79
      %p88 = scmp.eq.s32.totalorder %s31, 7
      %p89 = por %p87, %p88
      %p90 = scmp.ne.s32.totalorder %s79, %s80
      %p91 = scmp.eq.s32.totalorder %s31, 0
      %p92 = por %p90, %p91
      %p93 = scmp.ne.s32.totalorder %s79, %s80
      %p94 = scmp.eq.s32.totalorder %s32, 7
      %p95 = por %p93, %p94
      %p97 = scmp.ne.s32.totalorder %s80, %s96
      %p98 = scmp.eq.s32.totalorder %s32, 0
      %p99 = por %p97, %p98
      %s101 = sadd.s32 %s100, 1
      %p104 = scmp.eq.s32.totalorder %s26, 7
      %p105 = scmp.ne.s32.totalorder %s100, %s102
      %p106 = scmp.eq.s32.totalorder %s26, 0
      %p107 = por %p105, %p106
      %p108 = scmp.ne.s32.totalorder %s100, %s102
      %p109 = scmp.eq.s32.totalorder %s31, 7
      %p110 = por %p108, %p109
      %p111 = scmp.ne.s32.totalorder %s102, %s103
      %p112 = scmp.eq.s32.totalorder %s31, 0
      %p113 = por %p111, %p112
      %p114 = scmp.ne.s32.totalorder %s102, %s103
      %p115 = scmp.eq.s32.totalorder %s32, 7
      %p116 = por %p114, %p115
      %p118 = scmp.ne.s32.totalorder %s103, %s117
      %p119 = scmp.eq.s32.totalorder %s32, 0
      %p120 = por %p118, %p119
      %s122 = sadd.s32 %s121, 1
      %p125 = scmp.eq.s32.totalorder %s26, 7
      %p126 = scmp.ne.s32.totalorder %s121, %s123
      %p127 = scmp.eq.s32.totalorder %s26, 0
      %p128 = por %p126, %p127
      %p129 = scmp.ne.s32.totalorder %s121, %s123
      %p130 = scmp.eq.s32.totalorder %s31, 7
      %p131 = por %p129, %p130
      %p132 = scmp.ne.s32.totalorder %s123, %s124
      %p133 = scmp.eq.s32.totalorder %s31, 0
      %p134 = por %p132, %p133
      %p135 = scmp.ne.s32.totalorder %s123, %s124
      %p136 = scmp.eq.s32.totalorder %s32, 7
      %p137 = por %p135, %p136
      %p139 = scmp.ne.s32.totalorder %s124, %s138
      %p140 = scmp.eq.s32.totalorder %s32, 0
      %p141 = por %p139, %p140
      %s143 = sadd.s32 %s142, 1
      %p146 = scmp.eq.s32.totalorder %s26, 7
      %p147 = scmp.ne.s32.totalorder %s142, %s144
      %p148 = scmp.eq.s32.totalorder %s26, 0
      %p149 = por %p147, %p148
      %p150 = scmp.ne.s32.totalorder %s142, %s144
      %p151 = scmp.eq.s32.totalorder %s31, 7
      %p152 = por %p150, %p151
      %p153 = scmp.ne.s32.totalorder %s144, %s145
      %p154 = scmp.eq.s32.totalorder %s31, 0
      %p155 = por %p153, %p154
      %p156 = scmp.ne.s32.totalorder %s144, %s145
      %p157 = scmp.eq.s32.totalorder %s32, 7
      %p158 = por %p156, %p157
      %p160 = scmp.ne.s32.totalorder %s145, %s159
      %p161 = scmp.eq.s32.totalorder %s32, 0
      %p162 = por %p160, %p161
      %s164 = sadd.s32 %s163, 1
      %p167 = scmp.eq.s32.totalorder %s26, 7
      %p168 = scmp.ne.s32.totalorder %s163, %s165
      %p169 = scmp.eq.s32.totalorder %s26, 0
      %p170 = por %p168, %p169
      %p171 = scmp.ne.s32.totalorder %s163, %s165
      %p172 = scmp.eq.s32.totalorder %s31, 7
      %p173 = por %p171, %p172
      %p174 = scmp.ne.s32.totalorder %s165, %s166
      %p175 = scmp.eq.s32.totalorder %s31, 0
      %p176 = por %p174, %p175
      %p177 = scmp.ne.s32.totalorder %s165, %s166
      %p178 = scmp.eq.s32.totalorder %s32, 7
      %p179 = por %p177, %p178
      %p181 = scmp.ne.s32.totalorder %s166, %s180
      %p182 = scmp.eq.s32.totalorder %s32, 0
      %p183 = por %p181, %p182
      %s185 = sadd.s32 %s184, 1
      %p188 = scmp.eq.s32.totalorder %s26, 7
      %p189 = scmp.ne.s32.totalorder %s184, %s186
      %p190 = scmp.eq.s32.totalorder %s26, 0
      %p191 = por %p189, %p190
      %p192 = scmp.ne.s32.totalorder %s184, %s186
      %p193 = scmp.eq.s32.totalorder %s31, 7
      %p194 = por %p192, %p193
      %p195 = scmp.ne.s32.totalorder %s186, %s187
      %p196 = scmp.eq.s32.totalorder %s31, 0
      %p197 = por %p195, %p196
      %p198 = scmp.ne.s32.totalorder %s186, %s187
      %p199 = scmp.eq.s32.totalorder %s32, 7
      %p200 = por %p198, %p199
      %p202 = scmp.ne.s32.totalorder %s187, %s201
      %p203 = scmp.eq.s32.totalorder %s32, 0
      %p204 = por %p202, %p203
      %s206 = sadd.s32 %s205, 1
      %p209 = scmp.eq.s32.totalorder %s26, 7
      %p210 = scmp.ne.s32.totalorder %s205, %s207
      %p211 = scmp.eq.s32.totalorder %s26, 0
      %p212 = por %p210, %p211
      %p213 = scmp.ne.s32.totalorder %s205, %s207
      %p214 = scmp.eq.s32.totalorder %s31, 7
      %p215 = por %p213, %p214
      %p216 = scmp.ne.s32.totalorder %s207, %s208
      %p217 = scmp.eq.s32.totalorder %s31, 0
      %p218 = por %p216, %p217
      %p219 = scmp.ne.s32.totalorder %s207, %s208
      %p220 = scmp.eq.s32.totalorder %s32, 7
      %p221 = por %p219, %p220
      %p223 = scmp.ne.s32.totalorder %s208, %s222
      %p224 = scmp.eq.s32.totalorder %s32, 0
      %p225 = por %p223, %p224
      %s226 = ssub.s32 %s34, %s41
      %s227 = ssub.s32 %s33, %s45
      %s228 = sor.u32 %s226, %s227
      %p229 = scmp.eq.s32.totalorder %s228, 0
      %s231 = sadd.s32 %s230, 1
      %s232 = scalar_select %p229, %s230, %s231
      %p235 = pneg %p229
      %p236 = scmp.eq.s32.totalorder %s26, 7
      %p237 = por %p235, %p236
      %p238 = scmp.ne.s32.totalorder %s230, %s233
      %p239 = scmp.eq.s32.totalorder %s26, 0
      %p240 = por %p238, %p239
      %p241 = scmp.ne.s32.totalorder %s230, %s233
      %p242 = scmp.eq.s32.totalorder %s31, 7
      %p243 = por %p241, %p242
      %p244 = scmp.ne.s32.totalorder %s233, %s234
      %p245 = scmp.eq.s32.totalorder %s31, 0
      %p246 = por %p244, %p245
      %p247 = scmp.ne.s32.totalorder %s233, %s234
      %p248 = scmp.eq.s32.totalorder %s32, 7
      %p249 = por %p247, %p248
      %p251 = scmp.ne.s32.totalorder %s234, %s250
      %p252 = scmp.eq.s32.totalorder %s32, 0
      %p253 = por %p251, %p252
      %s254 = ssub.s32 %s33, %s45
      %p255 = scmp.eq.s32.totalorder %s254, 0
      %s257 = sadd.s32 %s256, 1
      %s258 = scalar_select %p255, %s256, %s257
      %p261 = pneg %p255
      %p262 = scmp.eq.s32.totalorder %s26, 7
      %p263 = por %p261, %p262
      %p264 = scmp.ne.s32.totalorder %s256, %s259
      %p265 = scmp.eq.s32.totalorder %s26, 0
      %p266 = por %p264, %p265
      %p267 = scmp.ne.s32.totalorder %s256, %s259
      %p268 = scmp.eq.s32.totalorder %s31, 7
      %p269 = por %p267, %p268
      %p270 = scmp.ne.s32.totalorder %s259, %s260
      %p271 = scmp.eq.s32.totalorder %s31, 0
      %p272 = por %p270, %p271
      %p273 = scmp.ne.s32.totalorder %s259, %s260
      %p274 = scmp.eq.s32.totalorder %s32, 7
      %p275 = por %p273, %p274
      %p277 = scmp.ne.s32.totalorder %s260, %s276
      %p278 = scmp.eq.s32.totalorder %s32, 0
      %p279 = por %p277, %p278
      %s280 = ssub.s32 %s33, %s45
      %p281 = scmp.eq.s32.totalorder %s280, 0
      %s283 = sadd.s32 %s282, 1
      %s284 = scalar_select %p281, %s282, %s283
      %p287 = pneg %p281
      %p288 = scmp.eq.s32.totalorder %s26, 7
      %p289 = por %p287, %p288
      %p290 = scmp.ne.s32.totalorder %s282, %s285
      %p291 = scmp.eq.s32.totalorder %s26, 0
      %p292 = por %p290, %p291
      %p293 = scmp.ne.s32.totalorder %s282, %s285
      %p294 = scmp.eq.s32.totalorder %s31, 7
      %p295 = por %p293, %p294
      %p296 = scmp.ne.s32.totalorder %s285, %s286
      %p297 = scmp.eq.s32.totalorder %s31, 0
      %p298 = por %p296, %p297
      %p299 = scmp.ne.s32.totalorder %s285, %s286
      %p300 = scmp.eq.s32.totalorder %s32, 7
      %p301 = por %p299, %p300
      %p303 = scmp.ne.s32.totalorder %s286, %s302
      %p304 = scmp.eq.s32.totalorder %s32, 0
      %p305 = por %p303, %p304
      %p306 = scmp.le.s32.totalorder 1, %s26
      %p307 = scmp.lt.s32.totalorder %s26, 9
      %p308 = pnand %p306, %p307
      %p309 = pneg %p308
      // Predicated region
      $region9: #{tpu_custom_call.1} parent=5 // pred_check
        _
      $region10: #{tpu_custom_call.1} parent=5 // pred_check_branch
        %311 = sbr.rel (%p308) target = $region12
      $region11: #{tpu_custom_call.1} parent=5 // pred_region
        %s312 = ssub.s32 %s26, 1
        // Predicated region
        $region13: #{tpu_custom_call.1} parent=11 // pred_check
          %p313 = pneg %p64
        $region14: #{tpu_custom_call.1} parent=11 // pred_check_branch
          %315 = sbr.rel (%p313) target = $region16
        $region15: #{tpu_custom_call.1} parent=11 // pred_region
          %p316 = scmp.lt.s32.totalorder %s35, 0
          %s317 = scalar_select %p316, %s35, 0
          %s318 = smul.addr %s317, 8
          %s319 = scalar_lea.vmem %s0, %s318
        $region16: #{tpu_custom_call.1} parent=11 // pred_fallthru
          _
        // Predicated region
        $region17: #{tpu_custom_call.1} parent=11 // pred_check
          %p320 = pneg %p113
        $region18: #{tpu_custom_call.1} parent=11 // pred_check_branch
          %322 = sbr.rel (%p320) target = $region20
        $region19: #{tpu_custom_call.1} parent=11 // pred_region
          %s324 = ssub.s32 16384, 16384
          %325 = vsyncadd [#allocation8], %s324
          %s326 = sshll.u32 [#allocation7], 4
          %s327 = int_to_ptr.vmem [resolvable:$true] %s326
          %332 = dma.hbm_to_vmem [thread:$0]  %s2, 16384, %s327, [#allocation8], 512, 512, 32
        $region20: #{tpu_custom_call.1} parent=11 // pred_fallthru
          _
        // Predicated region
        $region21: #{tpu_custom_call.1} parent=11 // pred_check
          %p333 = pneg %p134
        $region22: #{tpu_custom_call.1} parent=11 // pred_check_branch
          %335 = sbr.rel (%p333) target = $region24
        $region23: #{tpu_custom_call.1} parent=11 // pred_region
          _
        $region24: #{tpu_custom_call.1} parent=11 // pred_fallthru
          _
        // Predicated region
        $region25: #{tpu_custom_call.1} parent=11 // pred_check
          %p336 = pneg %p155
        $region26: #{tpu_custom_call.1} parent=11 // pred_check_branch
          %338 = sbr.rel (%p336) target = $region28
        $region27: #{tpu_custom_call.1} parent=11 // pred_region
          %s340 = ssub.s32 16384, 16384
          %341 = vsyncadd [#allocation8], %s340
          %s342 = sshll.u32 [#allocation9], 4
          %s343 = int_to_ptr.vmem [resolvable:$true] %s342
          %348 = dma.hbm_to_vmem [thread:$0]  %s4, 16384, %s343, [#allocation8], 512, 512, 32
        $region28: #{tpu_custom_call.1} parent=11 // pred_fallthru
          _
        // Predicated region
        $region29: #{tpu_custom_call.1} parent=11 // pred_check
          %p349 = pneg %p176
        $region30: #{tpu_custom_call.1} parent=11 // pred_check_branch
          %351 = sbr.rel (%p349) target = $region32
        $region31: #{tpu_custom_call.1} parent=11 // pred_region
          _
        $region32: #{tpu_custom_call.1} parent=11 // pred_fallthru
          _
        // Predicated region
        $region33: #{tpu_custom_call.1} parent=11 // pred_check
          %p352 = pneg %p197
        $region34: #{tpu_custom_call.1} parent=11 // pred_check_branch
          %354 = sbr.rel (%p352) target = $region36
        $region35: #{tpu_custom_call.1} parent=11 // pred_region
          %s356 = ssub.s32 2048, 2048
          %357 = vsyncadd [#allocation11], %s356
          %s358 = sshll.u32 [#allocation10], 4
          %s359 = int_to_ptr.vmem [resolvable:$true] %s358
          %364 = dma.hbm_to_vmem [thread:$0]  %s6, 2048, %s359, [#allocation11], 128, 128, 8
        $region36: #{tpu_custom_call.1} parent=11 // pred_fallthru
          _
        // Predicated region
        $region37: #{tpu_custom_call.1} parent=11 // pred_check
          %p365 = pneg %p218
        $region38: #{tpu_custom_call.1} parent=11 // pred_check_branch
          %367 = sbr.rel (%p365) target = $region40
        $region39: #{tpu_custom_call.1} parent=11 // pred_region
          _
        $region40: #{tpu_custom_call.1} parent=11 // pred_fallthru
          _
      $region12: #{tpu_custom_call.1} parent=5 // pred_fallthru
        _
      %p368 = scmp.lt.s32.totalorder %s26, 8
      // Predicated region
      $region41: #{tpu_custom_call.1} parent=5 // pred_check
        %p369 = pneg %p368
      $region42: #{tpu_custom_call.1} parent=5 // pred_check_branch
        %371 = sbr.rel (%p369) target = $region44
      $region43: #{tpu_custom_call.1} parent=5 // pred_region
        // Predicated region
        $region45: #{tpu_custom_call.1} parent=43 // pred_check
          %p372 = pneg %p86
        $region46: #{tpu_custom_call.1} parent=43 // pred_check_branch
          %374 = sbr.rel (%p372) target = $region48
        $region47: #{tpu_custom_call.1} parent=43 // pred_region
          %s375 = sand.u32 %s76, 1
          %s376 = scalar_lea.sflag [#allocation5], %s375
          %s377 = sand.u32 %s76, 1
          %s378 = smul.addr %s377, 8
          %s379 = scalar_lea.vmem [#allocation4], %s378
          %s381 = ssub.s32 128, 128
          %382 = vsyncadd %s376, %s381
          %s383 = sadd.s32 %s33, %s34
          %s384 = smul.addr %s383, 128
          %s385 = scalar_lea.hbm %s1, %s384
          %s387 = sshll.u32 %s379, 4
          %s388 = int_to_ptr.vmem [resolvable:$true] %s387
          %390 = dma.hbm_to_vmem [thread:$0]  %s385, 128, %s388, %s376
        $region48: #{tpu_custom_call.1} parent=43 // pred_fallthru
          _
      $region44: #{tpu_custom_call.1} parent=5 // pred_fallthru
        _
      %p391 = scmp.le.s32.totalorder 1, %s26
      %p392 = scmp.lt.s32.totalorder %s26, 9
      %p393 = pnand %p391, %p392
      %p394 = pneg %p393
      // Predicated region
      $region49: #{tpu_custom_call.1} parent=5 // pred_check
        _
      $region50: #{tpu_custom_call.1} parent=5 // pred_check_branch
        %396 = sbr.rel (%p393) target = $region52
      $region51: #{tpu_custom_call.1} parent=5 // pred_region
        %s397 = ssub.s32 %s26, 1
        %s398 = sand.u32 %s79, 1
        %s399 = scalar_lea.sflag [#allocation5], %s398
        %s400 = sand.u32 %s79, 1
        %s401 = smul.addr %s400, 8
        %s402 = scalar_lea.vmem [#allocation4], %s401
        // Predicated region
        $region53: #{tpu_custom_call.1} parent=51 // pred_check
          %p403 = pneg %p92
        $region54: #{tpu_custom_call.1} parent=51 // pred_check_branch
          %405 = sbr.rel (%p403) target = $region56
        $region55: #{tpu_custom_call.1} parent=51 // pred_region
          %406 = dma.done %s399, 128
        $region56: #{tpu_custom_call.1} parent=51 // pred_fallthru
          _
        // Predicated region
        $region57: #{tpu_custom_call.1} parent=51 // pred_check
          %p407 = pneg %p113
        $region58: #{tpu_custom_call.1} parent=51 // pred_check_branch
          %409 = sbr.rel (%p407) target = $region60
        $region59: #{tpu_custom_call.1} parent=51 // pred_region
          %410 = dma.done [#allocation8], 16384
        $region60: #{tpu_custom_call.1} parent=51 // pred_fallthru
          _
        // Predicated region
        $region61: #{tpu_custom_call.1} parent=51 // pred_check
          %p411 = pneg %p155
        $region62: #{tpu_custom_call.1} parent=51 // pred_check_branch
          %413 = sbr.rel (%p411) target = $region64
        $region63: #{tpu_custom_call.1} parent=51 // pred_region
          %414 = dma.done [#allocation8], 16384
        $region64: #{tpu_custom_call.1} parent=51 // pred_fallthru
          _
        // Predicated region
        $region65: #{tpu_custom_call.1} parent=51 // pred_check
          %p415 = pneg %p197
        $region66: #{tpu_custom_call.1} parent=51 // pred_check_branch
          %417 = sbr.rel (%p415) target = $region68
        $region67: #{tpu_custom_call.1} parent=51 // pred_region
          %418 = dma.done [#allocation11], 2048
        $region68: #{tpu_custom_call.1} parent=51 // pred_fallthru
          _
        %p419 = scmp.lt.s32.totalorder %s35, 0
        %s420 = scalar_select %p419, %s35, 0
        %s421 = smul.addr %s420, 8
        %s422 = scalar_lea.vmem %s0, %s421
        %p423 = pneg %p64
        %p424 = pneg %p61
        %s425 = sand.u32 %s79, 1
        %s426 = scalar_lea.sflag [#allocation5], %s425
        %s427 = sand.u32 %s79, 1
        %s428 = smul.addr %s427, 8
        %s429 = scalar_lea.vmem [#allocation4], %s428
        %p430 = pneg %p92
        %p431 = pneg %p89
        %p432 = pneg %p113
        %p433 = pneg %p110
        %p434 = pneg %p134
        %p435 = pneg %p131
        %p436 = pneg %p155
        %p437 = pneg %p152
        %p438 = pneg %p176
        %p439 = pneg %p173
        %p440 = pneg %p197
        %p441 = pneg %p194
        %p442 = pneg %p218
        %p443 = pneg %p215
        %p444 = pneg %p246
        %p445 = pneg %p243
        %s446 = sand.u32 %s233, 1
        %s447 = scalar_lea.sflag [#allocation6], %s446
        %s448 = sand.u32 %s233, 1
        %s449 = smul.addr %s448, 8
        %s450 = scalar_lea.vmem [#allocation12], %s449
        %p451 = pneg %p272
        %p452 = pneg %p269
        %p453 = pneg %p298
        %p454 = pneg %p295
        %p455 = scmp.lt.s32.totalorder %s35, 0
        %s456 = scalar_select %p455, %s35, 0
        %s457 = smul.addr %s456, 8
        %s458 = scalar_lea.vmem %s0, %s457
        %p459 = scmp.eq.s32.totalorder %s36, 0
        // Predicated region
        $region69: #{tpu_custom_call.1} parent=51 // pred_check
          %p460 = pneg %p459
        $region70: #{tpu_custom_call.1} parent=51 // pred_check_branch
          %462 = sbr.rel (%p460) target = $region72
        $region71: #{tpu_custom_call.1} parent=51 // pred_region
          %463 = vst [vmem:[#allocation2] sm:$0xff] 0.0
          %464 = vst [vmem:[#allocation2 + $0x8] sm:$0xff] 0.0
          %465 = vst [vmem:[#allocation3] sm:$0xff] 0.0
          %466 = vst [vmem:[#allocation3 + $0x8] sm:$0xff] 0.0
        $region72: #{tpu_custom_call.1} parent=51 // pred_fallthru
          _
        %v467 = vld [vmem:[%s458] sm:$0xff]
        %v468 = vstv %s36
        %vm469 = vcmp.lt.s32.totalorder %v468, %v467
        %v470 = vld [vmem:[%s402] sm:$0xff]
        %v471 = vld [vmem:[#allocation7] sm:$0xff]
        %v472 = vld [vmem:[#allocation7 + $0x8] sm:$0xff]
        %v473 = vld [vmem:[#allocation7 + $0x10] sm:$0xff]
        %v474 = vld [vmem:[#allocation7 + $0x18] sm:$0xff]
        %v475 = vld [vmem:[#allocation7 + $0x20] sm:$0xff]
        %v476 = vld [vmem:[#allocation7 + $0x28] sm:$0xff]
        %v477 = vld [vmem:[#allocation7 + $0x30] sm:$0xff]
        %v478 = vld [vmem:[#allocation7 + $0x38] sm:$0xff]
        %v479 = vld [vmem:[#allocation7 + $0x40] sm:$0xff]
        %v480 = vld [vmem:[#allocation7 + $0x48] sm:$0xff]
        %v481 = vld [vmem:[#allocation7 + $0x50] sm:$0xff]
        %v482 = vld [vmem:[#allocation7 + $0x58] sm:$0xff]
        %v483 = vld [vmem:[#allocation7 + $0x60] sm:$0xff]
        %v484 = vld [vmem:[#allocation7 + $0x68] sm:$0xff]
        %v485 = vld [vmem:[#allocation7 + $0x70] sm:$0xff]
        %v486 = vld [vmem:[#allocation7 + $0x78] sm:$0xff]
        %v487 = vld [vmem:[#allocation7 + $0x80] sm:$0xff]
        %v488 = vld [vmem:[#allocation7 + $0x88] sm:$0xff]
        %v489 = vld [vmem:[#allocation7 + $0x90] sm:$0xff]
        %v490 = vld [vmem:[#allocation7 + $0x98] sm:$0xff]
        %v491 = vld [vmem:[#allocation7 + $0xa0] sm:$0xff]
        %v492 = vld [vmem:[#allocation7 + $0xa8] sm:$0xff]
        %v493 = vld [vmem:[#allocation7 + $0xb0] sm:$0xff]
        %v494 = vld [vmem:[#allocation7 + $0xb8] sm:$0xff]
        %v495 = vld [vmem:[#allocation7 + $0xc0] sm:$0xff]
        %v496 = vld [vmem:[#allocation7 + $0xc8] sm:$0xff]
        %v497 = vld [vmem:[#allocation7 + $0xd0] sm:$0xff]
        %v498 = vld [vmem:[#allocation7 + $0xd8] sm:$0xff]
        %v499 = vld [vmem:[#allocation7 + $0xe0] sm:$0xff]
        %v500 = vld [vmem:[#allocation7 + $0xe8] sm:$0xff]
        %v501 = vld [vmem:[#allocation7 + $0xf0] sm:$0xff]
        %v502 = vld [vmem:[#allocation7 + $0xf8] sm:$0xff]
        %v503 = vld [vmem:[#allocation7 + $0x100] sm:$0xff]
        %v504 = vld [vmem:[#allocation7 + $0x108] sm:$0xff]
        %v505 = vld [vmem:[#allocation7 + $0x110] sm:$0xff]
        %v506 = vld [vmem:[#allocation7 + $0x118] sm:$0xff]
        %v507 = vld [vmem:[#allocation7 + $0x120] sm:$0xff]
        %v508 = vld [vmem:[#allocation7 + $0x128] sm:$0xff]
        %v509 = vld [vmem:[#allocation7 + $0x130] sm:$0xff]
        %v510 = vld [vmem:[#allocation7 + $0x138] sm:$0xff]
        %v511 = vld [vmem:[#allocation7 + $0x140] sm:$0xff]
        %v512 = vld [vmem:[#allocation7 + $0x148] sm:$0xff]
        %v513 = vld [vmem:[#allocation7 + $0x150] sm:$0xff]
        %v514 = vld [vmem:[#allocation7 + $0x158] sm:$0xff]
        %v515 = vld [vmem:[#allocation7 + $0x160] sm:$0xff]
        %v516 = vld [vmem:[#allocation7 + $0x168] sm:$0xff]
        %v517 = vld [vmem:[#allocation7 + $0x170] sm:$0xff]
        %v518 = vld [vmem:[#allocation7 + $0x178] sm:$0xff]
        %v519 = vld [vmem:[#allocation7 + $0x180] sm:$0xff]
        %v520 = vld [vmem:[#allocation7 + $0x188] sm:$0xff]
        %v521 = vld [vmem:[#allocation7 + $0x190] sm:$0xff]
        %v522 = vld [vmem:[#allocation7 + $0x198] sm:$0xff]
        %v523 = vld [vmem:[#allocation7 + $0x1a0] sm:$0xff]
        %v524 = vld [vmem:[#allocation7 + $0x1a8] sm:$0xff]
        %v525 = vld [vmem:[#allocation7 + $0x1b0] sm:$0xff]
        %v526 = vld [vmem:[#allocation7 + $0x1b8] sm:$0xff]
        %v527 = vld [vmem:[#allocation7 + $0x1c0] sm:$0xff]
        %v528 = vld [vmem:[#allocation7 + $0x1c8] sm:$0xff]
        %v529 = vld [vmem:[#allocation7 + $0x1d0] sm:$0xff]
        %v530 = vld [vmem:[#allocation7 + $0x1d8] sm:$0xff]
        %v531 = vld [vmem:[#allocation7 + $0x1e0] sm:$0xff]
        %v532 = vld [vmem:[#allocation7 + $0x1e8] sm:$0xff]
        %v533 = vld [vmem:[#allocation7 + $0x1f0] sm:$0xff]
        %v534 = vld [vmem:[#allocation7 + $0x1f8] sm:$0xff]
        %v535 = vld [vmem:[#allocation7 + $0x200] sm:$0xff]
        %v536 = vld [vmem:[#allocation7 + $0x208] sm:$0xff]
        %v537 = vld [vmem:[#allocation7 + $0x210] sm:$0xff]
        %v538 = vld [vmem:[#allocation7 + $0x218] sm:$0xff]
        %v539 = vld [vmem:[#allocation7 + $0x220] sm:$0xff]
        %v540 = vld [vmem:[#allocation7 + $0x228] sm:$0xff]
        %v541 = vld [vmem:[#allocation7 + $0x230] sm:$0xff]
        %v542 = vld [vmem:[#allocation7 + $0x238] sm:$0xff]
        %v543 = vld [vmem:[#allocation7 + $0x240] sm:$0xff]
        %v544 = vld [vmem:[#allocation7 + $0x248] sm:$0xff]
        %v545 = vld [vmem:[#allocation7 + $0x250] sm:$0xff]
        %v546 = vld [vmem:[#allocation7 + $0x258] sm:$0xff]
        %v547 = vld [vmem:[#allocation7 + $0x260] sm:$0xff]
        %v548 = vld [vmem:[#allocation7 + $0x268] sm:$0xff]
        %v549 = vld [vmem:[#allocation7 + $0x270] sm:$0xff]
        %v550 = vld [vmem:[#allocation7 + $0x278] sm:$0xff]
        %v551 = vld [vmem:[#allocation7 + $0x280] sm:$0xff]
        %v552 = vld [vmem:[#allocation7 + $0x288] sm:$0xff]
        %v553 = vld [vmem:[#allocation7 + $0x290] sm:$0xff]
        %v554 = vld [vmem:[#allocation7 + $0x298] sm:$0xff]
        %v555 = vld [vmem:[#allocation7 + $0x2a0] sm:$0xff]
        %v556 = vld [vmem:[#allocation7 + $0x2a8] sm:$0xff]
        %v557 = vld [vmem:[#allocation7 + $0x2b0] sm:$0xff]
        %v558 = vld [vmem:[#allocation7 + $0x2b8] sm:$0xff]
        %v559 = vld [vmem:[#allocation7 + $0x2c0] sm:$0xff]
        %v560 = vld [vmem:[#allocation7 + $0x2c8] sm:$0xff]
        %v561 = vld [vmem:[#allocation7 + $0x2d0] sm:$0xff]
        %v562 = vld [vmem:[#allocation7 + $0x2d8] sm:$0xff]
        %v563 = vld [vmem:[#allocation7 + $0x2e0] sm:$0xff]
        %v564 = vld [vmem:[#allocation7 + $0x2e8] sm:$0xff]
        %v565 = vld [vmem:[#allocation7 + $0x2f0] sm:$0xff]
        %v566 = vld [vmem:[#allocation7 + $0x2f8] sm:$0xff]
        %v567 = vld [vmem:[#allocation7 + $0x300] sm:$0xff]
        %v568 = vld [vmem:[#allocation7 + $0x308] sm:$0xff]
        %v569 = vld [vmem:[#allocation7 + $0x310] sm:$0xff]
        %v570 = vld [vmem:[#allocation7 + $0x318] sm:$0xff]
        %v571 = vld [vmem:[#allocation7 + $0x320] sm:$0xff]
        %v572 = vld [vmem:[#allocation7 + $0x328] sm:$0xff]
        %v573 = vld [vmem:[#allocation7 + $0x330] sm:$0xff]
        %v574 = vld [vmem:[#allocation7 + $0x338] sm:$0xff]
        %v575 = vld [vmem:[#allocation7 + $0x340] sm:$0xff]
        %v576 = vld [vmem:[#allocation7 + $0x348] sm:$0xff]
        %v577 = vld [vmem:[#allocation7 + $0x350] sm:$0xff]
        %v578 = vld [vmem:[#allocation7 + $0x358] sm:$0xff]
        %v579 = vld [vmem:[#allocation7 + $0x360] sm:$0xff]
        %v580 = vld [vmem:[#allocation7 + $0x368] sm:$0xff]
        %v581 = vld [vmem:[#allocation7 + $0x370] sm:$0xff]
        %v582 = vld [vmem:[#allocation7 + $0x378] sm:$0xff]
        %v583 = vld [vmem:[#allocation7 + $0x380] sm:$0xff]
        %v584 = vld [vmem:[#allocation7 + $0x388] sm:$0xff]
        %v585 = vld [vmem:[#allocation7 + $0x390] sm:$0xff]
        %v586 = vld [vmem:[#allocation7 + $0x398] sm:$0xff]
        %v587 = vld [vmem:[#allocation7 + $0x3a0] sm:$0xff]
        %v588 = vld [vmem:[#allocation7 + $0x3a8] sm:$0xff]
        %v589 = vld [vmem:[#allocation7 + $0x3b0] sm:$0xff]
        %v590 = vld [vmem:[#allocation7 + $0x3b8] sm:$0xff]
        %v591 = vld [vmem:[#allocation7 + $0x3c0] sm:$0xff]
        %v592 = vld [vmem:[#allocation7 + $0x3c8] sm:$0xff]
        %v593 = vld [vmem:[#allocation7 + $0x3d0] sm:$0xff]
        %v594 = vld [vmem:[#allocation7 + $0x3d8] sm:$0xff]
        %v595 = vld [vmem:[#allocation7 + $0x3e0] sm:$0xff]
        %v596 = vld [vmem:[#allocation7 + $0x3e8] sm:$0xff]
        %v597 = vld [vmem:[#allocation7 + $0x3f0] sm:$0xff]
        %v598 = vld [vmem:[#allocation7 + $0x3f8] sm:$0xff]
        %v599 = vld [vmem:[%s3] sm:$0xf]
        %v600 = vld [vmem:[#allocation2] sm:$0xff]
        %v601 = vld [vmem:[#allocation3] sm:$0xff]
        %v603 = vlaneseq
        %v604 = vshrl.u32 %v603, 7
        %v605 = vsub.s32 0, %v604
        %v606 = vrot.slane %v599, %v605
        %v607 = vlaneseq
        %v608 = vshrl.u32 %v607, 7
        %v609 = vsub.s32 1, %v608
        %v610 = vrot.slane %v599, %v609
        %v611 = vlaneseq
        %v612 = vshrl.u32 %v611, 7
        %v613 = vsub.s32 2, %v612
        %v614 = vrot.slane %v599, %v613
        %v615 = vlaneseq
        %v616 = vshrl.u32 %v615, 7
        %v617 = vsub.s32 3, %v616
        %v618 = vrot.slane %v599, %v617
        %623 = vmatprep.subr.mxu0 %v472
        %624 = vmatpush1.msra.mxu0 %v471
        %625 = vmatprep.subr.mxu0 %v476
        %626 = vmatpush1.msra.mxu0 %v475
        %627 = vmatprep.subr.mxu0 %v480
        %628 = vmatpush1.msra.mxu0 %v479
        %629 = vmatprep.subr.mxu0 %v484
        %630 = vmatpush1.msra.mxu0 %v483
        %631 = vmatprep.subr.mxu0 %v488
        %632 = vmatpush1.msra.mxu0 %v487
        %633 = vmatprep.subr.mxu0 %v492
        %634 = vmatpush1.msra.mxu0 %v491
        %635 = vmatprep.subr.mxu0 %v496
        %636 = vmatpush1.msra.mxu0 %v495
        %637 = vmatprep.subr.mxu0 %v500
        %638 = vmatpush1.msra.mxu0 %v499
        %639 = vmatprep.subr.mxu0 %v504
        %640 = vmatpush1.msra.mxu0 %v503
        %641 = vmatprep.subr.mxu0 %v508
        %642 = vmatpush1.msra.mxu0 %v507
        %643 = vmatprep.subr.mxu0 %v512
        %644 = vmatpush1.msra.mxu0 %v511
        %645 = vmatprep.subr.mxu0 %v516
        %646 = vmatpush1.msra.mxu0 %v515
        %647 = vmatprep.subr.mxu0 %v520
        %648 = vmatpush1.msra.mxu0 %v519
        %649 = vmatprep.subr.mxu0 %v524
        %650 = vmatpush1.msra.mxu0 %v523
        %651 = vmatprep.subr.mxu0 %v528
        %652 = vmatpush1.msra.mxu0 %v527
        %653 = vmatprep.subr.mxu0 %v532
        %654 = vmatpush1.msra.mxu0 %v531
        %655 = vmatprep.subr.mxu0 %v536
        %656 = vmatpush1.msra.mxu0 %v535
        %657 = vmatprep.subr.mxu0 %v540
        %658 = vmatpush1.msra.mxu0 %v539
        %659 = vmatprep.subr.mxu0 %v544
        %660 = vmatpush1.msra.mxu0 %v543
        %661 = vmatprep.subr.mxu0 %v548
        %662 = vmatpush1.msra.mxu0 %v547
        %663 = vmatprep.subr.mxu0 %v552
        %664 = vmatpush1.msra.mxu0 %v551
        %665 = vmatprep.subr.mxu0 %v556
        %666 = vmatpush1.msra.mxu0 %v555
        %667 = vmatprep.subr.mxu0 %v560
        %668 = vmatpush1.msra.mxu0 %v559
        %669 = vmatprep.subr.mxu0 %v564
        %670 = vmatpush1.msra.mxu0 %v563
        %671 = vmatprep.subr.mxu0 %v568
        %672 = vmatpush1.msra.mxu0 %v567
        %673 = vmatprep.subr.mxu0 %v572
        %674 = vmatpush1.msra.mxu0 %v571
        %675 = vmatprep.subr.mxu0 %v576
        %676 = vmatpush1.msra.mxu0 %v575
        %677 = vmatprep.subr.mxu0 %v580
        %678 = vmatpush1.msra.mxu0 %v579
        %679 = vmatprep.subr.mxu0 %v584
        %680 = vmatpush1.msra.mxu0 %v583
        %681 = vmatprep.subr.mxu0 %v588
        %682 = vmatpush1.msra.mxu0 %v587
        %683 = vmatprep.subr.mxu0 %v592
        %684 = vmatpush1.msra.mxu0 %v591
        %685 = vmatprep.subr.mxu0 %v596
        %686 = vmatpush1.msra.mxu0 %v595
        %687 = vmatprep.mubr.f32.mxu0 %v600
        %688 = vmatmul.mubr.f32.gmra.mrb[0].mxu0 %v470
        %v689 = vpop.f32.mrb[0].mxu0
        %v690 = vadd.f32 %v606, %v689
        %v691 = vpop.f32.mrb[0].mxu0
        %v692 = vadd.f32 %v610, %v691
        %693 = vdwg.mxu0
        %694 = vmatprep.subr.mxu0 %v474
        %695 = vmatpush1.msra.mxu0 %v473
        %696 = vmatprep.subr.mxu0 %v478
        %697 = vmatpush1.msra.mxu0 %v477
        %698 = vmatprep.subr.mxu0 %v482
        %699 = vmatpush1.msra.mxu0 %v481
        %700 = vmatprep.subr.mxu0 %v486
        %701 = vmatpush1.msra.mxu0 %v485
        %702 = vmatprep.subr.mxu0 %v490
        %703 = vmatpush1.msra.mxu0 %v489
        %704 = vmatprep.subr.mxu0 %v494
        %705 = vmatpush1.msra.mxu0 %v493
        %706 = vmatprep.subr.mxu0 %v498
        %707 = vmatpush1.msra.mxu0 %v497
        %708 = vmatprep.subr.mxu0 %v502
        %709 = vmatpush1.msra.mxu0 %v501
        %710 = vmatprep.subr.mxu0 %v506
        %711 = vmatpush1.msra.mxu0 %v505
        %712 = vmatprep.subr.mxu0 %v510
        %713 = vmatpush1.msra.mxu0 %v509
        %714 = vmatprep.subr.mxu0 %v514
        %715 = vmatpush1.msra.mxu0 %v513
        %716 = vmatprep.subr.mxu0 %v518
        %717 = vmatpush1.msra.mxu0 %v517
        %718 = vmatprep.subr.mxu0 %v522
        %719 = vmatpush1.msra.mxu0 %v521
        %720 = vmatprep.subr.mxu0 %v526
        %721 = vmatpush1.msra.mxu0 %v525
        %722 = vmatprep.subr.mxu0 %v530
        %723 = vmatpush1.msra.mxu0 %v529
        %724 = vmatprep.subr.mxu0 %v534
        %725 = vmatpush1.msra.mxu0 %v533
        %726 = vmatprep.subr.mxu0 %v538
        %727 = vmatpush1.msra.mxu0 %v537
        %728 = vmatprep.subr.mxu0 %v542
        %729 = vmatpush1.msra.mxu0 %v541
        %730 = vmatprep.subr.mxu0 %v546
        %731 = vmatpush1.msra.mxu0 %v545
        %732 = vmatprep.subr.mxu0 %v550
        %733 = vmatpush1.msra.mxu0 %v549
        %734 = vmatprep.subr.mxu0 %v554
        %735 = vmatpush1.msra.mxu0 %v553
        %736 = vmatprep.subr.mxu0 %v558
        %737 = vmatpush1.msra.mxu0 %v557
        %738 = vmatprep.subr.mxu0 %v562
        %739 = vmatpush1.msra.mxu0 %v561
        %740 = vmatprep.subr.mxu0 %v566
        %741 = vmatpush1.msra.mxu0 %v565
        %742 = vmatprep.subr.mxu0 %v570
        %743 = vmatpush1.msra.mxu0 %v569
        %744 = vmatprep.subr.mxu0 %v574
        %745 = vmatpush1.msra.mxu0 %v573
        %746 = vmatprep.subr.mxu0 %v578
        %747 = vmatpush1.msra.mxu0 %v577
        %748 = vmatprep.subr.mxu0 %v582
        %749 = vmatpush1.msra.mxu0 %v581
        %750 = vmatprep.subr.mxu0 %v586
        %751 = vmatpush1.msra.mxu0 %v585
        %752 = vmatprep.subr.mxu0 %v590
        %753 = vmatpush1.msra.mxu0 %v589
        %754 = vmatprep.subr.mxu0 %v594
        %755 = vmatpush1.msra.mxu0 %v593
        %756 = vmatprep.subr.mxu0 %v598
        %757 = vmatpush1.msra.mxu0 %v597
        %758 = vmatprep.mubr.f32.mxu0 %v600
        %759 = vmatmul.mubr.f32.gmra.mrb[0].mxu0 %v470
        %v760 = vpop.f32.mrb[0].mxu0
        %v761 = vadd.f32 %v614, %v760
        %v762 = vpop.f32.mrb[0].mxu0
        %v763 = vadd.f32 %v618, %v762
        %764 = vdwg.mxu0
        %v765 = vmul.f32 %v690, 0.5
        %v766 = vtanh.pop %v765
        %v767 = vadd.f32 %v766, 1.0
        %v768 = vmul.f32 %v767, 0.5
        %v769 = vmul.f32 %v692, 0.5
        %v770 = vtanh.pop %v769
        %v771 = vadd.f32 %v770, 1.0
        %v772 = vmul.f32 %v771, 0.5
        %v773 = vtanh.pop %v761
        %v774 = vmul.f32 %v763, 0.5
        %v775 = vtanh.pop %v774
        %v776 = vadd.f32 %v775, 1.0
        %v777 = vmul.f32 %v776, 0.5
        %v778 = vmul.f32 %v772, %v601
        %v779 = vmul.f32 %v768, %v773
        %v780 = vadd.f32 %v778, %v779
        %v781 = vtanh.pop %v780
        %v782 = vmul.f32 %v777, %v781
        %v783 = vsel %vm469, 1, 0
        %784 = vset.pattern.permute.xlu0 0
        %785 = vperm.xlu0 %784, %v783
        %v786 = vpop.permute.xlu0 %785
        %vm787 = vcmp.eq.s32.totalorder %v786, 1
        %v788 = vsel %vm787, %v780, %v601
        %v789 = vsel %vm787, %v782, %v600
        %790 = vst [vmem:[#allocation2] sm:$0xff] %v789
        %791 = vst [vmem:[#allocation3] sm:$0xff] %v788
        %v792 = vld [vmem:[#allocation9] sm:$0xff]
        %v793 = vld [vmem:[#allocation9 + $0x8] sm:$0xff]
        %v794 = vld [vmem:[#allocation9 + $0x10] sm:$0xff]
        %v795 = vld [vmem:[#allocation9 + $0x18] sm:$0xff]
        %v796 = vld [vmem:[#allocation9 + $0x20] sm:$0xff]
        %v797 = vld [vmem:[#allocation9 + $0x28] sm:$0xff]
        %v798 = vld [vmem:[#allocation9 + $0x30] sm:$0xff]
        %v799 = vld [vmem:[#allocation9 + $0x38] sm:$0xff]
        %v800 = vld [vmem:[#allocation9 + $0x40] sm:$0xff]
        %v801 = vld [vmem:[#allocation9 + $0x48] sm:$0xff]
        %v802 = vld [vmem:[#allocation9 + $0x50] sm:$0xff]
        %v803 = vld [vmem:[#allocation9 + $0x58] sm:$0xff]
        %v804 = vld [vmem:[#allocation9 + $0x60] sm:$0xff]
        %v805 = vld [vmem:[#allocation9 + $0x68] sm:$0xff]
        %v806 = vld [vmem:[#allocation9 + $0x70] sm:$0xff]
        %v807 = vld [vmem:[#allocation9 + $0x78] sm:$0xff]
        %v808 = vld [vmem:[#allocation9 + $0x80] sm:$0xff]
        %v809 = vld [vmem:[#allocation9 + $0x88] sm:$0xff]
        %v810 = vld [vmem:[#allocation9 + $0x90] sm:$0xff]
        %v811 = vld [vmem:[#allocation9 + $0x98] sm:$0xff]
        %v812 = vld [vmem:[#allocation9 + $0xa0] sm:$0xff]
        %v813 = vld [vmem:[#allocation9 + $0xa8] sm:$0xff]
        %v814 = vld [vmem:[#allocation9 + $0xb0] sm:$0xff]
        %v815 = vld [vmem:[#allocation9 + $0xb8] sm:$0xff]
        %v816 = vld [vmem:[#allocation9 + $0xc0] sm:$0xff]
        %v817 = vld [vmem:[#allocation9 + $0xc8] sm:$0xff]
        %v818 = vld [vmem:[#allocation9 + $0xd0] sm:$0xff]
        %v819 = vld [vmem:[#allocation9 + $0xd8] sm:$0xff]
        %v820 = vld [vmem:[#allocation9 + $0xe0] sm:$0xff]
        %v821 = vld [vmem:[#allocation9 + $0xe8] sm:$0xff]
        %v822 = vld [vmem:[#allocation9 + $0xf0] sm:$0xff]
        %v823 = vld [vmem:[#allocation9 + $0xf8] sm:$0xff]
        %v824 = vld [vmem:[#allocation9 + $0x100] sm:$0xff]
        %v825 = vld [vmem:[#allocation9 + $0x108] sm:$0xff]
        %v826 = vld [vmem:[#allocation9 + $0x110] sm:$0xff]
        %v827 = vld [vmem:[#allocation9 + $0x118] sm:$0xff]
        %v828 = vld [vmem:[#allocation9 + $0x120] sm:$0xff]
        %v829 = vld [vmem:[#allocation9 + $0x128] sm:$0xff]
        %v830 = vld [vmem:[#allocation9 + $0x130] sm:$0xff]
        %v831 = vld [vmem:[#allocation9 + $0x138] sm:$0xff]
        %v832 = vld [vmem:[#allocation9 + $0x140] sm:$0xff]
        %v833 = vld [vmem:[#allocation9 + $0x148] sm:$0xff]
        %v834 = vld [vmem:[#allocation9 + $0x150] sm:$0xff]
        %v835 = vld [vmem:[#allocation9 + $0x158] sm:$0xff]
        %v836 = vld [vmem:[#allocation9 + $0x160] sm:$0xff]
        %v837 = vld [vmem:[#allocation9 + $0x168] sm:$0xff]
        %v838 = vld [vmem:[#allocation9 + $0x170] sm:$0xff]
        %v839 = vld [vmem:[#allocation9 + $0x178] sm:$0xff]
        %v840 = vld [vmem:[#allocation9 + $0x180] sm:$0xff]
        %v841 = vld [vmem:[#allocation9 + $0x188] sm:$0xff]
        %v842 = vld [vmem:[#allocation9 + $0x190] sm:$0xff]
        %v843 = vld [vmem:[#allocation9 + $0x198] sm:$0xff]
        %v844 = vld [vmem:[#allocation9 + $0x1a0] sm:$0xff]
        %v845 = vld [vmem:[#allocation9 + $0x1a8] sm:$0xff]
        %v846 = vld [vmem:[#allocation9 + $0x1b0] sm:$0xff]
        %v847 = vld [vmem:[#allocation9 + $0x1b8] sm:$0xff]
        %v848 = vld [vmem:[#allocation9 + $0x1c0] sm:$0xff]
        %v849 = vld [vmem:[#allocation9 + $0x1c8] sm:$0xff]
        %v850 = vld [vmem:[#allocation9 + $0x1d0] sm:$0xff]
        %v851 = vld [vmem:[#allocation9 + $0x1d8] sm:$0xff]
        %v852 = vld [vmem:[#allocation9 + $0x1e0] sm:$0xff]
        %v853 = vld [vmem:[#allocation9 + $0x1e8] sm:$0xff]
        %v854 = vld [vmem:[#allocation9 + $0x1f0] sm:$0xff]
        %v855 = vld [vmem:[#allocation9 + $0x1f8] sm:$0xff]
        %v856 = vld [vmem:[#allocation9 + $0x200] sm:$0xff]
        %v857 = vld [vmem:[#allocation9 + $0x208] sm:$0xff]
        %v858 = vld [vmem:[#allocation9 + $0x210] sm:$0xff]
        %v859 = vld [vmem:[#allocation9 + $0x218] sm:$0xff]
        %v860 = vld [vmem:[#allocation9 + $0x220] sm:$0xff]
        %v861 = vld [vmem:[#allocation9 + $0x228] sm:$0xff]
        %v862 = vld [vmem:[#allocation9 + $0x230] sm:$0xff]
        %v863 = vld [vmem:[#allocation9 + $0x238] sm:$0xff]
        %v864 = vld [vmem:[#allocation9 + $0x240] sm:$0xff]
        %v865 = vld [vmem:[#allocation9 + $0x248] sm:$0xff]
        %v866 = vld [vmem:[#allocation9 + $0x250] sm:$0xff]
        %v867 = vld [vmem:[#allocation9 + $0x258] sm:$0xff]
        %v868 = vld [vmem:[#allocation9 + $0x260] sm:$0xff]
        %v869 = vld [vmem:[#allocation9 + $0x268] sm:$0xff]
        %v870 = vld [vmem:[#allocation9 + $0x270] sm:$0xff]
        %v871 = vld [vmem:[#allocation9 + $0x278] sm:$0xff]
        %v872 = vld [vmem:[#allocation9 + $0x280] sm:$0xff]
        %v873 = vld [vmem:[#allocation9 + $0x288] sm:$0xff]
        %v874 = vld [vmem:[#allocation9 + $0x290] sm:$0xff]
        %v875 = vld [vmem:[#allocation9 + $0x298] sm:$0xff]
        %v876 = vld [vmem:[#allocation9 + $0x2a0] sm:$0xff]
        %v877 = vld [vmem:[#allocation9 + $0x2a8] sm:$0xff]
        %v878 = vld [vmem:[#allocation9 + $0x2b0] sm:$0xff]
        %v879 = vld [vmem:[#allocation9 + $0x2b8] sm:$0xff]
        %v880 = vld [vmem:[#allocation9 + $0x2c0] sm:$0xff]
        %v881 = vld [vmem:[#allocation9 + $0x2c8] sm:$0xff]
        %v882 = vld [vmem:[#allocation9 + $0x2d0] sm:$0xff]
        %v883 = vld [vmem:[#allocation9 + $0x2d8] sm:$0xff]
        %v884 = vld [vmem:[#allocation9 + $0x2e0] sm:$0xff]
        %v885 = vld [vmem:[#allocation9 + $0x2e8] sm:$0xff]
        %v886 = vld [vmem:[#allocation9 + $0x2f0] sm:$0xff]
        %v887 = vld [vmem:[#allocation9 + $0x2f8] sm:$0xff]
        %v888 = vld [vmem:[#allocation9 + $0x300] sm:$0xff]
        %v889 = vld [vmem:[#allocation9 + $0x308] sm:$0xff]
        %v890 = vld [vmem:[#allocation9 + $0x310] sm:$0xff]
        %v891 = vld [vmem:[#allocation9 + $0x318] sm:$0xff]
        %v892 = vld [vmem:[#allocation9 + $0x320] sm:$0xff]
        %v893 = vld [vmem:[#allocation9 + $0x328] sm:$0xff]
        %v894 = vld [vmem:[#allocation9 + $0x330] sm:$0xff]
        %v895 = vld [vmem:[#allocation9 + $0x338] sm:$0xff]
        %v896 = vld [vmem:[#allocation9 + $0x340] sm:$0xff]
        %v897 = vld [vmem:[#allocation9 + $0x348] sm:$0xff]
        %v898 = vld [vmem:[#allocation9 + $0x350] sm:$0xff]
        %v899 = vld [vmem:[#allocation9 + $0x358] sm:$0xff]
        %v900 = vld [vmem:[#allocation9 + $0x360] sm:$0xff]
        %v901 = vld [vmem:[#allocation9 + $0x368] sm:$0xff]
        %v902 = vld [vmem:[#allocation9 + $0x370] sm:$0xff]
        %v903 = vld [vmem:[#allocation9 + $0x378] sm:$0xff]
        %v904 = vld [vmem:[#allocation9 + $0x380] sm:$0xff]
        %v905 = vld [vmem:[#allocation9 + $0x388] sm:$0xff]
        %v906 = vld [vmem:[#allocation9 + $0x390] sm:$0xff]
        %v907 = vld [vmem:[#allocation9 + $0x398] sm:$0xff]
        %v908 = vld [vmem:[#allocation9 + $0x3a0] sm:$0xff]
        %v909 = vld [vmem:[#allocation9 + $0x3a8] sm:$0xff]
        %v910 = vld [vmem:[#allocation9 + $0x3b0] sm:$0xff]
        %v911 = vld [vmem:[#allocation9 + $0x3b8] sm:$0xff]
        %v912 = vld [vmem:[#allocation9 + $0x3c0] sm:$0xff]
        %v913 = vld [vmem:[#allocation9 + $0x3c8] sm:$0xff]
        %v914 = vld [vmem:[#allocation9 + $0x3d0] sm:$0xff]
        %v915 = vld [vmem:[#allocation9 + $0x3d8] sm:$0xff]
        %v916 = vld [vmem:[#allocation9 + $0x3e0] sm:$0xff]
        %v917 = vld [vmem:[#allocation9 + $0x3e8] sm:$0xff]
        %v918 = vld [vmem:[#allocation9 + $0x3f0] sm:$0xff]
        %v919 = vld [vmem:[#allocation9 + $0x3f8] sm:$0xff]
        %v920 = vld [vmem:[%s5] sm:$0xf]
        %s921 = scalar_lea.vmem [#allocation2], 8
        %v922 = vld [vmem:[%s921] sm:$0xff]
        %s923 = scalar_lea.vmem [#allocation3], 8
        %v924 = vld [vmem:[%s923] sm:$0xff]
        %v926 = vlaneseq
        %v927 = vshrl.u32 %v926, 7
        %v928 = vsub.s32 0, %v927
        %v929 = vrot.slane %v920, %v928
        %v930 = vlaneseq
        %v931 = vshrl.u32 %v930, 7
        %v932 = vsub.s32 1, %v931
        %v933 = vrot.slane %v920, %v932
        %v934 = vlaneseq
        %v935 = vshrl.u32 %v934, 7
        %v936 = vsub.s32 2, %v935
        %v937 = vrot.slane %v920, %v936
        %v938 = vlaneseq
        %v939 = vshrl.u32 %v938, 7
        %v940 = vsub.s32 3, %v939
        %v941 = vrot.slane %v920, %v940
        %946 = vmatprep.subr.mxu0 %v793
        %947 = vmatpush1.msra.mxu0 %v792
        %948 = vmatprep.subr.mxu0 %v797
        %949 = vmatpush1.msra.mxu0 %v796
        %950 = vmatprep.subr.mxu0 %v801
        %951 = vmatpush1.msra.mxu0 %v800
        %952 = vmatprep.subr.mxu0 %v805
        %953 = vmatpush1.msra.mxu0 %v804
        %954 = vmatprep.subr.mxu0 %v809
        %955 = vmatpush1.msra.mxu0 %v808
        %956 = vmatprep.subr.mxu0 %v813
        %957 = vmatpush1.msra.mxu0 %v812
        %958 = vmatprep.subr.mxu0 %v817
        %959 = vmatpush1.msra.mxu0 %v816
        %960 = vmatprep.subr.mxu0 %v821
        %961 = vmatpush1.msra.mxu0 %v820
        %962 = vmatprep.subr.mxu0 %v825
        %963 = vmatpush1.msra.mxu0 %v824
        %964 = vmatprep.subr.mxu0 %v829
        %965 = vmatpush1.msra.mxu0 %v828
        %966 = vmatprep.subr.mxu0 %v833
        %967 = vmatpush1.msra.mxu0 %v832
        %968 = vmatprep.subr.mxu0 %v837
        %969 = vmatpush1.msra.mxu0 %v836
        %970 = vmatprep.subr.mxu0 %v841
        %971 = vmatpush1.msra.mxu0 %v840
        %972 = vmatprep.subr.mxu0 %v845
        %973 = vmatpush1.msra.mxu0 %v844
        %974 = vmatprep.subr.mxu0 %v849
        %975 = vmatpush1.msra.mxu0 %v848
        %976 = vmatprep.subr.mxu0 %v853
        %977 = vmatpush1.msra.mxu0 %v852
        %978 = vmatprep.subr.mxu0 %v857
        %979 = vmatpush1.msra.mxu0 %v856
        %980 = vmatprep.subr.mxu0 %v861
        %981 = vmatpush1.msra.mxu0 %v860
        %982 = vmatprep.subr.mxu0 %v865
        %983 = vmatpush1.msra.mxu0 %v864
        %984 = vmatprep.subr.mxu0 %v869
        %985 = vmatpush1.msra.mxu0 %v868
        %986 = vmatprep.subr.mxu0 %v873
        %987 = vmatpush1.msra.mxu0 %v872
        %988 = vmatprep.subr.mxu0 %v877
        %989 = vmatpush1.msra.mxu0 %v876
        %990 = vmatprep.subr.mxu0 %v881
        %991 = vmatpush1.msra.mxu0 %v880
        %992 = vmatprep.subr.mxu0 %v885
        %993 = vmatpush1.msra.mxu0 %v884
        %994 = vmatprep.subr.mxu0 %v889
        %995 = vmatpush1.msra.mxu0 %v888
        %996 = vmatprep.subr.mxu0 %v893
        %997 = vmatpush1.msra.mxu0 %v892
        %998 = vmatprep.subr.mxu0 %v897
        %999 = vmatpush1.msra.mxu0 %v896
        %1000 = vmatprep.subr.mxu0 %v901
        %1001 = vmatpush1.msra.mxu0 %v900
        %1002 = vmatprep.subr.mxu0 %v905
        %1003 = vmatpush1.msra.mxu0 %v904
        %1004 = vmatprep.subr.mxu0 %v909
        %1005 = vmatpush1.msra.mxu0 %v908
        %1006 = vmatprep.subr.mxu0 %v913
        %1007 = vmatpush1.msra.mxu0 %v912
        %1008 = vmatprep.subr.mxu0 %v917
        %1009 = vmatpush1.msra.mxu0 %v916
        %1010 = vmatprep.mubr.f32.mxu0 %v922
        %1011 = vmatmul.mubr.f32.gmra.mrb[0].mxu0 %v789
        %v1012 = vpop.f32.mrb[0].mxu0
        %v1013 = vadd.f32 %v929, %v1012
        %v1014 = vpop.f32.mrb[0].mxu0
        %v1015 = vadd.f32 %v933, %v1014
        %1016 = vdwg.mxu0
        %1017 = vmatprep.subr.mxu0 %v795
        %1018 = vmatpush1.msra.mxu0 %v794
        %1019 = vmatprep.subr.mxu0 %v799
        %1020 = vmatpush1.msra.mxu0 %v798
        %1021 = vmatprep.subr.mxu0 %v803
        %1022 = vmatpush1.msra.mxu0 %v802
        %1023 = vmatprep.subr.mxu0 %v807
        %1024 = vmatpush1.msra.mxu0 %v806
        %1025 = vmatprep.subr.mxu0 %v811
        %1026 = vmatpush1.msra.mxu0 %v810
        %1027 = vmatprep.subr.mxu0 %v815
        %1028 = vmatpush1.msra.mxu0 %v814
        %1029 = vmatprep.subr.mxu0 %v819
        %1030 = vmatpush1.msra.mxu0 %v818
        %1031 = vmatprep.subr.mxu0 %v823
        %1032 = vmatpush1.msra.mxu0 %v822
        %1033 = vmatprep.subr.mxu0 %v827
        %1034 = vmatpush1.msra.mxu0 %v826
        %1035 = vmatprep.subr.mxu0 %v831
        %1036 = vmatpush1.msra.mxu0 %v830
        %1037 = vmatprep.subr.mxu0 %v835
        %1038 = vmatpush1.msra.mxu0 %v834
        %1039 = vmatprep.subr.mxu0 %v839
        %1040 = vmatpush1.msra.mxu0 %v838
        %1041 = vmatprep.subr.mxu0 %v843
        %1042 = vmatpush1.msra.mxu0 %v842
        %1043 = vmatprep.subr.mxu0 %v847
        %1044 = vmatpush1.msra.mxu0 %v846
        %1045 = vmatprep.subr.mxu0 %v851
        %1046 = vmatpush1.msra.mxu0 %v850
        %1047 = vmatprep.subr.mxu0 %v855
        %1048 = vmatpush1.msra.mxu0 %v854
        %1049 = vmatprep.subr.mxu0 %v859
        %1050 = vmatpush1.msra.mxu0 %v858
        %1051 = vmatprep.subr.mxu0 %v863
        %1052 = vmatpush1.msra.mxu0 %v862
        %1053 = vmatprep.subr.mxu0 %v867
        %1054 = vmatpush1.msra.mxu0 %v866
        %1055 = vmatprep.subr.mxu0 %v871
        %1056 = vmatpush1.msra.mxu0 %v870
        %1057 = vmatprep.subr.mxu0 %v875
        %1058 = vmatpush1.msra.mxu0 %v874
        %1059 = vmatprep.subr.mxu0 %v879
        %1060 = vmatpush1.msra.mxu0 %v878
        %1061 = vmatprep.subr.mxu0 %v883
        %1062 = vmatpush1.msra.mxu0 %v882
        %1063 = vmatprep.subr.mxu0 %v887
        %1064 = vmatpush1.msra.mxu0 %v886
        %1065 = vmatprep.subr.mxu0 %v891
        %1066 = vmatpush1.msra.mxu0 %v890
        %1067 = vmatprep.subr.mxu0 %v895
        %1068 = vmatpush1.msra.mxu0 %v894
        %1069 = vmatprep.subr.mxu0 %v899
        %1070 = vmatpush1.msra.mxu0 %v898
        %1071 = vmatprep.subr.mxu0 %v903
        %1072 = vmatpush1.msra.mxu0 %v902
        %1073 = vmatprep.subr.mxu0 %v907
        %1074 = vmatpush1.msra.mxu0 %v906
        %1075 = vmatprep.subr.mxu0 %v911
        %1076 = vmatpush1.msra.mxu0 %v910
        %1077 = vmatprep.subr.mxu0 %v915
        %1078 = vmatpush1.msra.mxu0 %v914
        %1079 = vmatprep.subr.mxu0 %v919
        %1080 = vmatpush1.msra.mxu0 %v918
        %1081 = vmatprep.mubr.f32.mxu0 %v922
        %1082 = vmatmul.mubr.f32.gmra.mrb[0].mxu0 %v789
        %v1083 = vpop.f32.mrb[0].mxu0
        %v1084 = vadd.f32 %v937, %v1083
        %v1085 = vpop.f32.mrb[0].mxu0
        %v1086 = vadd.f32 %v941, %v1085
        %1087 = vdwg.mxu0
        %v1088 = vmul.f32 %v1013, 0.5
        %v1089 = vtanh.pop %v1088
        %v1090 = vadd.f32 %v1089, 1.0
        %v1091 = vmul.f32 %v1090, 0.5
        %v1092 = vmul.f32 %v1015, 0.5
        %v1093 = vtanh.pop %v1092
        %v1094 = vadd.f32 %v1093, 1.0
        %v1095 = vmul.f32 %v1094, 0.5
        %v1096 = vtanh.pop %v1084
        %v1097 = vmul.f32 %v1086, 0.5
        %v1098 = vtanh.pop %v1097
        %v1099 = vadd.f32 %v1098, 1.0
        %v1100 = vmul.f32 %v1099, 0.5
        %v1101 = vmul.f32 %v1095, %v924
        %v1102 = vmul.f32 %v1091, %v1096
        %v1103 = vadd.f32 %v1101, %v1102
        %v1104 = vtanh.pop %v1103
        %v1105 = vmul.f32 %v1100, %v1104
        %v1106 = vsel %vm787, %v1103, %v924
        %v1107 = vsel %vm787, %v1105, %v922
        %1108 = vst [vmem:[%s921] sm:$0xff] %v1107
        %1109 = vst [vmem:[%s923] sm:$0xff] %v1106
        %v1110 = vsel %vm787, %v1105, 0.0
        %v1111 = vld [vmem:[#allocation10] sm:$0xff]
        %v1112 = vld [vmem:[#allocation10 + $0x8] sm:$0xff]
        %v1113 = vld [vmem:[#allocation10 + $0x10] sm:$0xff]
        %v1114 = vld [vmem:[#allocation10 + $0x18] sm:$0xff]
        %v1115 = vld [vmem:[#allocation10 + $0x20] sm:$0xff]
        %v1116 = vld [vmem:[#allocation10 + $0x28] sm:$0xff]
        %v1117 = vld [vmem:[#allocation10 + $0x30] sm:$0xff]
        %v1118 = vld [vmem:[#allocation10 + $0x38] sm:$0xff]
        %v1119 = vld [vmem:[#allocation10 + $0x40] sm:$0xff]
        %v1120 = vld [vmem:[#allocation10 + $0x48] sm:$0xff]
        %v1121 = vld [vmem:[#allocation10 + $0x50] sm:$0xff]
        %v1122 = vld [vmem:[#allocation10 + $0x58] sm:$0xff]
        %v1123 = vld [vmem:[#allocation10 + $0x60] sm:$0xff]
        %v1124 = vld [vmem:[#allocation10 + $0x68] sm:$0xff]
        %v1125 = vld [vmem:[#allocation10 + $0x70] sm:$0xff]
        %v1126 = vld [vmem:[#allocation10 + $0x78] sm:$0xff]
        %v1127 = vld [vmem:[%s7] sm:$0x1]
        %v1129 = vlaneseq
        %v1130 = vshrl.u32 %v1129, 7
        %v1131 = vsub.s32 0, %v1130
        %v1132 = vrot.slane %v1127, %v1131
        %1134 = vmatprep.subr.mxu0 0.0
        %1135 = vmatpush1.msra.mxu0 %v1111
        %1136 = vmatprep.subr.mxu0 0.0
        %1137 = vmatpush1.msra.mxu0 %v1112
        %1138 = vmatprep.subr.mxu0 0.0
        %1139 = vmatpush1.msra.mxu0 %v1113
        %1140 = vmatprep.subr.mxu0 0.0
        %1141 = vmatpush1.msra.mxu0 %v1114
        %1142 = vmatprep.subr.mxu0 0.0
        %1143 = vmatpush1.msra.mxu0 %v1115
        %1144 = vmatprep.subr.mxu0 0.0
        %1145 = vmatpush1.msra.mxu0 %v1116
        %1146 = vmatprep.subr.mxu0 0.0
        %1147 = vmatpush1.msra.mxu0 %v1117
        %1148 = vmatprep.subr.mxu0 0.0
        %1149 = vmatpush1.msra.mxu0 %v1118
        %1150 = vmatprep.subr.mxu0 0.0
        %1151 = vmatpush1.msra.mxu0 %v1119
        %1152 = vmatprep.subr.mxu0 0.0
        %1153 = vmatpush1.msra.mxu0 %v1120
        %1154 = vmatprep.subr.mxu0 0.0
        %1155 = vmatpush1.msra.mxu0 %v1121
        %1156 = vmatprep.subr.mxu0 0.0
        %1157 = vmatpush1.msra.mxu0 %v1122
        %1158 = vmatprep.subr.mxu0 0.0
        %1159 = vmatpush1.msra.mxu0 %v1123
        %1160 = vmatprep.subr.mxu0 0.0
        %1161 = vmatpush1.msra.mxu0 %v1124
        %1162 = vmatprep.subr.mxu0 0.0
        %1163 = vmatpush1.msra.mxu0 %v1125
        %1164 = vmatprep.subr.mxu0 0.0
        %1165 = vmatpush1.msra.mxu0 %v1126
        %1166 = vmatprep.subr.mxu0 0.0
        %1167 = vmatpush1.msra.mxu0 0.0
        %1168 = vmatprep.subr.mxu0 0.0
        %1169 = vmatpush1.msra.mxu0 0.0
        %1170 = vmatprep.subr.mxu0 0.0
        %1171 = vmatpush1.msra.mxu0 0.0
        %1172 = vmatprep.subr.mxu0 0.0
        %1173 = vmatpush1.msra.mxu0 0.0
        %1174 = vmatprep.subr.mxu0 0.0
        %1175 = vmatpush1.msra.mxu0 0.0
        %1176 = vmatprep.subr.mxu0 0.0
        %1177 = vmatpush1.msra.mxu0 0.0
        %1178 = vmatprep.subr.mxu0 0.0
        %1179 = vmatpush1.msra.mxu0 0.0
        %1180 = vmatprep.subr.mxu0 0.0
        %1181 = vmatpush1.msra.mxu0 0.0
        %1182 = vmatprep.subr.mxu0 0.0
        %1183 = vmatpush1.msra.mxu0 0.0
        %1184 = vmatprep.subr.mxu0 0.0
        %1185 = vmatpush1.msra.mxu0 0.0
        %1186 = vmatprep.subr.mxu0 0.0
        %1187 = vmatpush1.msra.mxu0 0.0
        %1188 = vmatprep.subr.mxu0 0.0
        %1189 = vmatpush1.msra.mxu0 0.0
        %1190 = vmatprep.subr.mxu0 0.0
        %1191 = vmatpush1.msra.mxu0 0.0
        %1192 = vmatprep.subr.mxu0 0.0
        %1193 = vmatpush1.msra.mxu0 0.0
        %1194 = vmatprep.subr.mxu0 0.0
        %1195 = vmatpush1.msra.mxu0 0.0
        %1196 = vmatprep.subr.mxu0 0.0
        %1197 = vmatpush1.msra.mxu0 0.0
        %1198 = vmatprep.mubr.f32.mxu0 0.0
        %1199 = vmatmul.mubr.f32.gmra.mrb[0].mxu0 %v1110
        %v1200 = vpop.f32.mrb[0].mxu0
        %v1201 = vadd.f32 %v1132, %v1200
        %v1202 = vpop.f32.mrb[0].mxu0
        %1203 = vdwg.mxu0
        %1204 = vst [vmem:[%s450] sm:$0xff] %v1201
        %p1205 = scmp.eq.s32.totalorder %s36, 7
        // Predicated region
        $region73: #{tpu_custom_call.1} parent=51 // pred_check
          %p1206 = pneg %p1205
        $region74: #{tpu_custom_call.1} parent=51 // pred_check_branch
          %1208 = sbr.rel (%p1206) target = $region76
        $region75: #{tpu_custom_call.1} parent=51 // pred_region
          %v1209 = vld [vmem:[#allocation2] sm:$0xff]
          %v1210 = vld [vmem:[#allocation2 + $0x8] sm:$0xff]
          %1211 = vst [vmem:[#allocation13] sm:$0xff] %v1209
          %1212 = vst [vmem:[#allocation13 + $0x8] sm:$0xff] %v1210
          %v1213 = vld [vmem:[#allocation3] sm:$0xff]
          %v1214 = vld [vmem:[#allocation3 + $0x8] sm:$0xff]
          %1215 = vst [vmem:[#allocation15] sm:$0xff] %v1213
          %1216 = vst [vmem:[#allocation15 + $0x8] sm:$0xff] %v1214
        $region76: #{tpu_custom_call.1} parent=51 // pred_fallthru
          _
        %s1217 = sand.u32 %s233, 1
        %s1218 = scalar_lea.sflag [#allocation6], %s1217
        %s1219 = sand.u32 %s233, 1
        %s1220 = smul.addr %s1219, 8
        %s1221 = scalar_lea.vmem [#allocation12], %s1220
        // Predicated region
        $region77: #{tpu_custom_call.1} parent=51 // pred_check
          %p1222 = pneg %p243
        $region78: #{tpu_custom_call.1} parent=51 // pred_check_branch
          %1224 = sbr.rel (%p1222) target = $region80
        $region79: #{tpu_custom_call.1} parent=51 // pred_region
          %s1226 = ssub.s32 128, 128
          %1227 = vsyncadd %s1218, %s1226
          %s1228 = sadd.s32 %s35, %s36
          %s1229 = smul.addr %s1228, 128
          %s1230 = scalar_lea.hbm %s8, %s1229
          %s1232 = sshll.u32 %s1221, 4
          %s1233 = int_to_ptr.vmem [resolvable:$true] %s1232
          %1235 = dma.vmem_to_hbm [thread:$0]  %s1233, 128, %s1230, %s1218
        $region80: #{tpu_custom_call.1} parent=51 // pred_fallthru
          _
        // Predicated region
        $region81: #{tpu_custom_call.1} parent=51 // pred_check
          %p1236 = pneg %p269
        $region82: #{tpu_custom_call.1} parent=51 // pred_check_branch
          %1238 = sbr.rel (%p1236) target = $region84
        $region83: #{tpu_custom_call.1} parent=51 // pred_region
          %s1240 = ssub.s32 256, 256
          %1241 = vsyncadd [#allocation14], %s1240
          %s1242 = smul.addr %s35, 128
          %s1243 = scalar_lea.hbm %s9, %s1242
          %s1244 = sshll.u32 [#allocation13], 4
          %s1245 = int_to_ptr.vmem [resolvable:$true] %s1244
          %1250 = dma.vmem_to_hbm [thread:$0]  %s1245, 256, %s1243, [#allocation14], 128, 128, 8
        $region84: #{tpu_custom_call.1} parent=51 // pred_fallthru
          _
        // Predicated region
        $region85: #{tpu_custom_call.1} parent=51 // pred_check
          %p1251 = pneg %p295
        $region86: #{tpu_custom_call.1} parent=51 // pred_check_branch
          %1253 = sbr.rel (%p1251) target = $region88
        $region87: #{tpu_custom_call.1} parent=51 // pred_region
          %s1255 = ssub.s32 256, 256
          %1256 = vsyncadd [#allocation14], %s1255
          %s1257 = smul.addr %s35, 128
          %s1258 = scalar_lea.hbm %s10, %s1257
          %s1259 = sshll.u32 [#allocation15], 4
          %s1260 = int_to_ptr.vmem [resolvable:$true] %s1259
          %1265 = dma.vmem_to_hbm [thread:$0]  %s1260, 256, %s1258, [#allocation14], 128, 128, 8
        $region88: #{tpu_custom_call.1} parent=51 // pred_fallthru
          _
        // Predicated region
        $region89: #{tpu_custom_call.1} parent=51 // pred_check
          %p1266 = pneg %p269
        $region90: #{tpu_custom_call.1} parent=51 // pred_check_branch
          %1268 = sbr.rel (%p1266) target = $region92
        $region91: #{tpu_custom_call.1} parent=51 // pred_region
          %1269 = dma.done [#allocation14], 256
        $region92: #{tpu_custom_call.1} parent=51 // pred_fallthru
          _
        // Predicated region
        $region93: #{tpu_custom_call.1} parent=51 // pred_check
          %p1270 = pneg %p295
        $region94: #{tpu_custom_call.1} parent=51 // pred_check_branch
          %1272 = sbr.rel (%p1270) target = $region96
        $region95: #{tpu_custom_call.1} parent=51 // pred_region
          %1273 = dma.done [#allocation14], 256
        $region96: #{tpu_custom_call.1} parent=51 // pred_fallthru
          _
      $region52: #{tpu_custom_call.1} parent=5 // pred_fallthru
        _
      %p1274 = scmp.le.s32.totalorder 2, %s26
      // Predicated region
      $region97: #{tpu_custom_call.1} parent=5 // pred_check
        %p1275 = pneg %p1274
      $region98: #{tpu_custom_call.1} parent=5 // pred_check_branch
        %1277 = sbr.rel (%p1275) target = $region100
      $region99: #{tpu_custom_call.1} parent=5 // pred_region
        %s1278 = ssub.s32 %s26, 2
        // Predicated region
        $region101: #{tpu_custom_call.1} parent=99 // pred_check
          %p1279 = pneg %p249
        $region102: #{tpu_custom_call.1} parent=99 // pred_check_branch
          %1281 = sbr.rel (%p1279) target = $region104
        $region103: #{tpu_custom_call.1} parent=99 // pred_region
          %s1282 = sand.u32 %s234, 1
          %s1283 = scalar_lea.sflag [#allocation6], %s1282
          %s1284 = sand.u32 %s234, 1
          %s1285 = smul.addr %s1284, 8
          %s1286 = scalar_lea.vmem [#allocation12], %s1285
          %1287 = dma.done %s1283, 128
        $region104: #{tpu_custom_call.1} parent=99 // pred_fallthru
          _
      $region100: #{tpu_custom_call.1} parent=5 // pred_fallthru
        _
    $region6: #{tpu_custom_call.1} parent=1 // loop_footer
      %s30 = sadd.s32 1, %s26
    $region7: #{tpu_custom_call.1} parent=1 // loop_footer_branch
      %25 = sbr.rel target = $region3
    $region8: #{tpu_custom_call.1} parent=1 // loop_exit
      _
    %1288 = vsyncpa [#allocation5], 1
    %s1289 = scalar_lea.sflag [#allocation5], 1
    %1290 = vsyncpa %s1289, 1
    %1291 = vsyncpa [#allocation8], 1
    %1292 = vsyncpa [#allocation11], 1
    %1293 = vsyncpa [#allocation6], 1
    %s1294 = scalar_lea.sflag [#allocation6], 1
    %1295 = vsyncpa %s1294, 1
    %1296 = vsyncpa [#allocation14], 1

</llo_original>
